<compile_context>
chip_gen: v7x
topology: tpu7x:2x2x1
jax: 0.10.0
libtpu: 0.0.40
codegen_flags: <defaults>
</compile_context>

<pallas_src>
import math
import functools

import jax
import jax.numpy as jnp
import numpy as np
from jax.experimental import pallas as pl
from jax.experimental.pallas import tpu as pltpu


# ----------------------------- kernels ---------------------------------------

def _layernorm(x, gamma, beta, eps=1e-5):
    mu = jnp.mean(x, axis=-1, keepdims=True)
    var = jnp.mean((x - mu) ** 2, axis=-1, keepdims=True)   # biased var (PyTorch LayerNorm)
    return (x - mu) * jax.lax.rsqrt(var + eps) * gamma + beta


def encoder_layers_kernel(x_ref,
                          wqkv_ref, bqkv_ref, wo_ref, bo_ref,
                          g1_ref, be1_ref, w1_ref, b1_ref,
                          w2_ref, b2_ref, g2_ref, be2_ref,
                          o_ref, x_scr, *, bb, L, nhead):
    """One (batch-block, layer) grid step of the transformer encoder stack."""
    layer = pl.program_id(1)
    N, H = x_scr.shape                       # N = bb * L
    dh = H // nhead
    scale = 1.0 / math.sqrt(dh)

    @pl.when(layer == 0)
    def _():                                 # load this batch block's activations once
        x_scr[...] = x_ref[...].astype(x_scr.dtype)

    x = x_scr[...]                           # bf16 [N, H], VMEM-resident across layers
    x32 = x.astype(jnp.float32)

    # ---- multi-head self-attention (post-norm block 1) ------------------------
    qkv = jnp.dot(x, wqkv_ref[0],
                  preferred_element_type=jnp.float32) + bqkv_ref[0]    # [N, 3H] f32
    q = qkv[:, :H] * scale                   # fold 1/sqrt(dh) into q
    k = qkv[:, H:2 * H]
    v = qkv[:, 2 * H:]

    # Merge (head, batch) into ONE leading batch dim so attention runs as a single
    # batched einsum pair instead of a per-head Python matmul loop.
    def to_heads(t):                         # [N, H] -> [nhead*bb, L, dh]
        t3 = t.reshape(bb, L, H)
        return jnp.concatenate(
            [t3[:, :, h * dh:(h + 1) * dh] for h in range(nhead)], axis=0)

    qh = to_heads(q).astype(jnp.bfloat16)
    kh = to_heads(k).astype(jnp.bfloat16)
    vh = to_heads(v).astype(jnp.bfloat16)

    # causal mask (True above diagonal in PyTorch -> -inf here), built in-kernel
    row = jax.lax.broadcasted_iota(jnp.int32, (L, L), 0)
    col = jax.lax.broadcasted_iota(jnp.int32, (L, L), 1)
    mask = jnp.where(row >= col, 0.0, -1e30).astype(jnp.float32)

    s = jnp.einsum('xqd,xkd->xqk', qh, kh,
                   preferred_element_type=jnp.float32) + mask          # [X, L, L] f32
    s = s - jnp.max(s, axis=-1, keepdims=True)
    p = jnp.exp(s)
    p = p * pl.reciprocal(jnp.sum(p, axis=-1, keepdims=True), approx=True)
    a = jnp.einsum('xqk,xkd->xqd', p.astype(jnp.bfloat16), vh,
                   preferred_element_type=jnp.float32)                 # [X, L, dh] f32

    # merge heads back to [N, H] and apply ONE full-K output projection
    attn = jnp.concatenate(
        [a[h * bb:(h + 1) * bb] for h in range(nhead)], axis=-1)       # [bb, L, H] f32
    attn = jnp.dot(attn.reshape(N, H).astype(jnp.bfloat16), wo_ref[0],
                   preferred_element_type=jnp.float32) + bo_ref[0]     # [N, H] f32

    y = _layernorm(x32 + attn, g1_ref[0], be1_ref[0])                  # f32

    # ---- feed-forward (dim_feedforward == hidden_size in the module), relu ----
    ff = jnp.dot(y.astype(jnp.bfloat16), w1_ref[0],
                 preferred_element_type=jnp.float32) + b1_ref[0]
    ff = jnp.maximum(ff, 0.0)
    ff = jnp.dot(ff.astype(jnp.bfloat16), w2_ref[0],
                 preferred_element_type=jnp.float32) + b2_ref[0]

    xn = _layernorm(y + ff, g2_ref[0], be2_ref[0])                     # f32 [N, H]

    x_scr[...] = xn.astype(x_scr.dtype)      # bf16 carry to the next layer
    o_ref[...] = xn.astype(o_ref.dtype)      # flushed to HBM when the batch block changes


def prediction_kernel(x_ref, wp_ref, bp_ref, o_ref):
    """Prediction linear over one lane-dense vocab tile."""
    o_ref[...] = (jnp.dot(x_ref[...].astype(jnp.bfloat16), wp_ref[...],
                          preferred_element_type=jnp.float32) + bp_ref[...])


# ----------------------------- wrapper ---------------------------------------

def _round_up(x, m):
    return (x + m - 1) // m * m


def transf_model_forward(batch, params, nhead, num_layers, *, batch_block=1, v_tile=128):
    """batch: int32 [B, L] token ids -> logits [B, L, V]."""
    B, L = batch.shape
    pe = params["pe"]
    assert L <= pe.shape[0], "sequence longer than positional-encoding buffer"

    # TODO(synk): embedding gather + positional-encoding add stay as tiny JAX glue
    # (data-dependent gather); dropout is identity (eval mode).
    x = params["embedding"][batch] + pe[:L][None]                      # [B, L, H] f32
    H = x.shape[-1]
    assert H % nhead == 0
    N = B * L
    x2d = x.reshape(N, H).astype(jnp.float32)

    bb = batch_block
    assert B % bb == 0 and (bb * L) % 8 == 0

    lp = params["layers"]
    weights = (lp["wqkv"], lp["bqkv"], lp["wo"], lp["bo"],
               lp["g1"], lp["be1"], lp["w1"], lp["b1"],
               lp["w2"], lp["b2"], lp["g2"], lp["be2"])

    def wspec(arr):
        # stream layer l's slice of the stacked weights for each grid step
        return pl.BlockSpec((1,) + arr.shape[1:],
                            lambda b, l, _nz=arr.ndim - 1: (l,) + (0,) * _nz)

    act_spec = pl.BlockSpec((bb * L, H), lambda b, l: (b, 0))

    # size the scoped VMEM request from the actual per-step working set (+ headroom)
    blk_bytes = 2 * (bb * L * H * 4)
    blk_bytes += sum(int(np.prod(w.shape[1:])) * w.dtype.itemsize for w in weights)
    vmem_limit = int(min(max(4 * blk_bytes + 8 * 2 ** 20, 16 * 2 ** 20), 48 * 2 ** 20))

    enc = pl.pallas_call(
        functools.partial(encoder_layers_kernel, bb=bb, L=L, nhead=nhead),
        out_shape=jax.ShapeDtypeStruct((N, H), jnp.float32),
        grid=(B // bb, num_layers),
        in_specs=[act_spec] + [wspec(w) for w in weights],
        out_specs=pl.BlockSpec((bb * L, H), lambda b, l: (b, 0)),
        scratch_shapes=[pltpu.VMEM((bb * L, H), jnp.bfloat16)],
        compiler_params=pltpu.CompilerParams(
            dimension_semantics=("parallel", "arbitrary"),
            vmem_limit_bytes=vmem_limit),
    )(x2d, *weights)

    # ---- prediction linear, tiled over vocab in lane-dense 128-wide tiles ----
    wp, bp = params["wp"], params["bp"]
    V = wp.shape[-1]
    Vp = _round_up(V, v_tile)
    wp_p = jnp.pad(wp, ((0, 0), (0, Vp - V)))
    bp_p = jnp.pad(bp, ((0, 0), (0, Vp - V)))

    logits = pl.pallas_call(
        prediction_kernel,
        out_shape=jax.ShapeDtypeStruct((N, Vp), jnp.float32),
        grid=(Vp // v_tile,),
        in_specs=[pl.BlockSpec((N, H), lambda j: (0, 0)),
                  pl.BlockSpec((H, v_tile), lambda j: (0, j)),
                  pl.BlockSpec((1, v_tile), lambda j: (0, j))],
        out_specs=pl.BlockSpec((N, v_tile), lambda j: (0, j)),
        compiler_params=pltpu.CompilerParams(
            dimension_semantics=("parallel",)),
    )(enc, wp_p, bp_p)

    return logits[:, :V].reshape(B, L, V)


# ----------------------------- params -----------------------------------------

def init_params(key, vocab_size, hidden_size, embedding_size, num_layers, max_len=512):
    assert hidden_size == embedding_size, "d_model must equal embedding dim (as in the PyTorch module)"
    H = hidden_size
    keys = jax.random.split(key, 3)

    def nrm(k, shape, scale=0.05, dtype=jnp.float32):
        return (jax.random.normal(k, shape, jnp.float32) * scale).astype(dtype)

    params = {}
    params["embedding"] = nrm(keys[0], (vocab_size, embedding_size), 1.0)

    # PositionalEncoding buffer (same formula as the PyTorch module)
    position = jnp.arange(max_len, dtype=jnp.float32)[:, None]
    div_term = jnp.exp(jnp.arange(0, embedding_size, 2, dtype=jnp.float32)
                       * (-math.log(10000.0) / embedding_size))
    pe = jnp.zeros((max_len, embedding_size), jnp.float32)
    pe = pe.at[:, 0::2].set(jnp.sin(position * div_term))
    pe = pe.at[:, 1::2].set(jnp.cos(position * div_term))
    params["pe"] = pe

    # stacked per-layer weights (leading dim = num_layers); matmul weights in bf16,
    # biases / LayerNorm params in f32 (elementwise path stays f32).
    lkeys = jax.random.split(keys[1], num_layers * 8)
    bf16 = jnp.bfloat16

    def stack(j, shape, dtype=jnp.float32):
        return jnp.stack([nrm(lkeys[l * 8 + j], shape, dtype=dtype)
                          for l in range(num_layers)], axis=0)

    params["layers"] = dict(
        wqkv=stack(0, (H, 3 * H), dtype=bf16), bqkv=stack(1, (1, 3 * H)),
        wo=stack(2, (H, H), dtype=bf16),       bo=stack(3, (1, H)),
        g1=jnp.ones((num_layers, 1, H), jnp.float32),
        be1=jnp.zeros((num_layers, 1, H), jnp.float32),
        w1=stack(4, (H, H), dtype=bf16),       b1=stack(5, (1, H)),
        w2=stack(6, (H, H), dtype=bf16),       b2=stack(7, (1, H)),
        g2=jnp.ones((num_layers, 1, H), jnp.float32),
        be2=jnp.zeros((num_layers, 1, H), jnp.float32),
    )

    pk = jax.random.split(keys[2], 2)
    params["wp"] = nrm(pk[0], (H, vocab_size), dtype=bf16)
    params["bp"] = nrm(pk[1], (1, vocab_size))
    return params


# ----------------------------- pure-JAX reference ------------------------------

def ref_forward(batch, params, nhead, num_layers):
    B, L = batch.shape
    f32 = lambda t: t.astype(jnp.float32)
    x = params["embedding"][batch] + params["pe"][:L][None]
    mask = jnp.where(jnp.tril(jnp.ones((L, L), dtype=bool)), 0.0, -1e30)
    H = x.shape[-1]
    dh = H // nhead

    def ln(t, g, b):
        mu = t.mean(-1, keepdims=True)
        var = ((t - mu) ** 2).mean(-1, keepdims=True)
        return (t - mu) / jnp.sqrt(var + 1e-5) * g + b

    lp = params["layers"]
    for l in range(num_layers):
        qkv = x @ f32(lp["wqkv"][l]) + lp["bqkv"][l, 0]
        q, k, v = qkv[..., :H], qkv[..., H:2 * H], qkv[..., 2 * H:]
        qh = q.reshape(B, L, nhead, dh).transpose(0, 2, 1, 3)
        kh = k.reshape(B, L, nhead, dh).transpose(0, 2, 1, 3)
        vh = v.reshape(B, L, nhead, dh).transpose(0, 2, 1, 3)
        s = jnp.einsum("bhqd,bhkd->bhqk", qh, kh) / math.sqrt(dh) + mask
        a = jnp.einsum("bhqk,bhkd->bhqd", jax.nn.softmax(s, -1), vh)
        a = a.transpose(0, 2, 1, 3).reshape(B, L, H) @ f32(lp["wo"][l]) + lp["bo"][l, 0]
        y = ln(x + a, lp["g1"][l, 0], lp["be1"][l, 0])
        ff = jnp.maximum(y @ f32(lp["w1"][l]) + lp["b1"][l, 0], 0.0) @ f32(lp["w2"][l]) + lp["b2"][l, 0]
        x = ln(y + ff, lp["g2"][l, 0], lp["be2"][l, 0])
    return x @ f32(params["wp"]) + params["bp"][0]


# ----------------------------- main --------------------------------------------

if __name__ == "__main__":
    VOCAB, HIDDEN, EMB, LAYERS, HEADS = 64, 32, 32, 2, 4
    B, L = 2, 8

    key = jax.random.PRNGKey(0)
    pkey, dkey = jax.random.split(key)
    params = init_params(pkey, VOCAB, HIDDEN, EMB, LAYERS)
    batch = jax.random.randint(dkey, (B, L), 0, VOCAB, dtype=jnp.int32)

    logits = transf_model_forward(batch, params, HEADS, LAYERS, batch_block=1)
    logits = jax.block_until_ready(logits)

    assert logits.shape == (B, L, VOCAB)
    ref = ref_forward(batch, params, HEADS, LAYERS)
    # bf16 matmul inputs + approx softmax reciprocal vs f32 reference -> loose tolerance
    assert np.allclose(np.asarray(logits), np.asarray(ref), rtol=2e-2, atol=2e-2), \
        "Pallas output does not match JAX reference"

    print("KERNEL_OK")
</pallas_src>

<mosaic_0001>
module attributes {stable_mosaic.version = 11 : i64} {
  func.func @encoder_layers_kernel(%arg0: i32, %arg1: i32, %arg2: memref<8x32xf32, #tpu.memory_space<vmem>>, %arg3: memref<1x32x96xbf16, #tpu.memory_space<vmem>>, %arg4: memref<1x1x96xf32, #tpu.memory_space<vmem>>, %arg5: memref<1x32x32xbf16, #tpu.memory_space<vmem>>, %arg6: memref<1x1x32xf32, #tpu.memory_space<vmem>>, %arg7: memref<1x1x32xf32, #tpu.memory_space<vmem>>, %arg8: memref<1x1x32xf32, #tpu.memory_space<vmem>>, %arg9: memref<1x32x32xbf16, #tpu.memory_space<vmem>>, %arg10: memref<1x1x32xf32, #tpu.memory_space<vmem>>, %arg11: memref<1x32x32xbf16, #tpu.memory_space<vmem>>, %arg12: memref<1x1x32xf32, #tpu.memory_space<vmem>>, %arg13: memref<1x1x32xf32, #tpu.memory_space<vmem>>, %arg14: memref<1x1x32xf32, #tpu.memory_space<vmem>>, %arg15: memref<8x32xf32, #tpu.memory_space<vmem>>, %arg16: memref<8x32xbf16, #tpu.memory_space<vmem>>) attributes {dimension_semantics = [#tpu.dimension_semantics<parallel>, #tpu.dimension_semantics<arbitrary>], iteration_bounds = array<i64: 2, 2>, scalar_prefetch = 0 : i64, scratch_operands = 1 : i64, tpu.core_type = #tpu.core_type<tc>, window_params = [{transform_indices = @transform_0, window_bounds = array<i64: 8, 32>}, {transform_indices = @transform_1, window_bounds = array<i64: 1, 32, 96>}, {transform_indices = @transform_2, window_bounds = array<i64: 1, 1, 96>}, {transform_indices = @transform_3, window_bounds = array<i64: 1, 32, 32>}, {transform_indices = @transform_4, window_bounds = array<i64: 1, 1, 32>}, {transform_indices = @transform_5, window_bounds = array<i64: 1, 1, 32>}, {transform_indices = @transform_6, window_bounds = array<i64: 1, 1, 32>}, {transform_indices = @transform_7, window_bounds = array<i64: 1, 32, 32>}, {transform_indices = @transform_8, window_bounds = array<i64: 1, 1, 32>}, {transform_indices = @transform_9, window_bounds = array<i64: 1, 32, 32>}, {transform_indices = @transform_10, window_bounds = array<i64: 1, 1, 32>}, {transform_indices = @transform_11, window_bounds = array<i64: 1, 1, 32>}, {transform_indices = @transform_12, window_bounds = array<i64: 1, 1, 32>}, {transform_indices = @transform_13, window_bounds = array<i64: 8, 32>}]} {
    %c0_i32 = arith.constant 0 : i32
    %0 = arith.cmpi eq, %arg1, %c0_i32 : i32
    %1 = arith.extui %0 : i1 to i32
    %c0_i32_0 = arith.constant 0 : i32
    %2 = arith.cmpi ne, %1, %c0_i32_0 : i32
    scf.if %2 {
      %c0_63 = arith.constant 0 : index
      %c0_64 = arith.constant 0 : index
      %149 = vector.load %arg2[%c0_63, %c0_64] : memref<8x32xf32, #tpu.memory_space<vmem>>, vector<8x32xf32>
      %150 = arith.truncf %149 : vector<8x32xf32> to vector<8x32xbf16>
      %c0_65 = arith.constant 0 : index
      %c0_66 = arith.constant 0 : index
      %151 = vector.load %arg16[%c0_65, %c0_66] : memref<8x32xbf16, #tpu.memory_space<vmem>>, vector<8x32xbf16>
      tpu.vector_store %arg16[%c0_65, %c0_66], %150 {strides = array<i32>} : memref<8x32xbf16, #tpu.memory_space<vmem>>, vector<8x32xbf16>,
    } else {
    }
    %c0 = arith.constant 0 : index
    %c0_1 = arith.constant 0 : index
    %3 = vector.load %arg16[%c0, %c0_1] : memref<8x32xbf16, #tpu.memory_space<vmem>>, vector<8x32xbf16>
    %4 = arith.extf %3 : vector<8x32xbf16> to vector<8x32xf32>
    %c0_2 = arith.constant 0 : index
    %c0_3 = arith.constant 0 : index
    %c0_4 = arith.constant 0 : index
    %5 = vector.load %arg3[%c0_2, %c0_3, %c0_4] : memref<1x32x96xbf16, #tpu.memory_space<vmem>>, vector<1x32x96xbf16>
    %6 = vector.shape_cast %5 : vector<1x32x96xbf16> to vector<32x96xbf16>
    %cst = arith.constant dense<0.000000e+00> : vector<8x96xf32>
    %7 = tpu.matmul %3, %6, %cst {dimension_numbers = #tpu.dot_dimension_numbers<[1], [0], [0], [1], [0, 0, 1, 1], [], []>} : vector<8x32xbf16>, vector<32x96xbf16>, vector<8x96xf32> -> vector<8x96xf32>
    %c0_5 = arith.constant 0 : index
    %c0_6 = arith.constant 0 : index
    %c0_7 = arith.constant 0 : index
    %8 = vector.load %arg4[%c0_5, %c0_6, %c0_7] : memref<1x1x96xf32, #tpu.memory_space<vmem>>, vector<1x1x96xf32>
    %9 = vector.shape_cast %8 : vector<1x1x96xf32> to vector<1x96xf32>
    %10 = vector.broadcast %9 : vector<1x96xf32> to vector<8x96xf32>
    %11 = arith.addf %7, %10 : vector<8x96xf32>
    %12 = vector.extract_strided_slice %11 {offsets = [0, 0], sizes = [8, 32], strides = [1, 1]} : vector<8x96xf32> to vector<8x32xf32>
    %cst_8 = arith.constant 0.353553385 : f32
    %13 = vector.broadcast %cst_8 : f32 to vector<8x32xf32>
    %14 = arith.mulf %12, %13 : vector<8x32xf32>
    %15 = vector.extract_strided_slice %11 {offsets = [0, 32], sizes = [8, 32], strides = [1, 1]} : vector<8x96xf32> to vector<8x32xf32>
    %16 = vector.extract_strided_slice %11 {offsets = [0, 64], sizes = [8, 32], strides = [1, 1]} : vector<8x96xf32> to vector<8x32xf32>
    %17 = vector.shape_cast %14 : vector<8x32xf32> to vector<1x8x32xf32>
    %18 = vector.extract_strided_slice %17 {offsets = [0, 0, 0], sizes = [1, 8, 8], strides = [1, 1, 1]} : vector<1x8x32xf32> to vector<1x8x8xf32>
    %19 = vector.extract_strided_slice %17 {offsets = [0, 0, 8], sizes = [1, 8, 8], strides = [1, 1, 1]} : vector<1x8x32xf32> to vector<1x8x8xf32>
    %20 = vector.extract_strided_slice %17 {offsets = [0, 0, 16], sizes = [1, 8, 8], strides = [1, 1, 1]} : vector<1x8x32xf32> to vector<1x8x8xf32>
    %21 = vector.extract_strided_slice %17 {offsets = [0, 0, 24], sizes = [1, 8, 8], strides = [1, 1, 1]} : vector<1x8x32xf32> to vector<1x8x8xf32>
    %22 = tpu.concatenate %18, %19, %20, %21 in 0 : vector<1x8x8xf32>, vector<1x8x8xf32>, vector<1x8x8xf32>, vector<1x8x8xf32> -> vector<4x8x8xf32>
    %23 = arith.truncf %22 : vector<4x8x8xf32> to vector<4x8x8xbf16>
    %24 = vector.shape_cast %15 : vector<8x32xf32> to vector<1x8x32xf32>
    %25 = vector.extract_strided_slice %24 {offsets = [0, 0, 0], sizes = [1, 8, 8], strides = [1, 1, 1]} : vector<1x8x32xf32> to vector<1x8x8xf32>
    %26 = vector.extract_strided_slice %24 {offsets = [0, 0, 8], sizes = [1, 8, 8], strides = [1, 1, 1]} : vector<1x8x32xf32> to vector<1x8x8xf32>
    %27 = vector.extract_strided_slice %24 {offsets = [0, 0, 16], sizes = [1, 8, 8], strides = [1, 1, 1]} : vector<1x8x32xf32> to vector<1x8x8xf32>
    %28 = vector.extract_strided_slice %24 {offsets = [0, 0, 24], sizes = [1, 8, 8], strides = [1, 1, 1]} : vector<1x8x32xf32> to vector<1x8x8xf32>
    %29 = tpu.concatenate %25, %26, %27, %28 in 0 : vector<1x8x8xf32>, vector<1x8x8xf32>, vector<1x8x8xf32>, vector<1x8x8xf32> -> vector<4x8x8xf32>
    %30 = arith.truncf %29 : vector<4x8x8xf32> to vector<4x8x8xbf16>
    %31 = vector.shape_cast %16 : vector<8x32xf32> to vector<1x8x32xf32>
    %32 = vector.extract_strided_slice %31 {offsets = [0, 0, 0], sizes = [1, 8, 8], strides = [1, 1, 1]} : vector<1x8x32xf32> to vector<1x8x8xf32>
    %33 = vector.extract_strided_slice %31 {offsets = [0, 0, 8], sizes = [1, 8, 8], strides = [1, 1, 1]} : vector<1x8x32xf32> to vector<1x8x8xf32>
    %34 = vector.extract_strided_slice %31 {offsets = [0, 0, 16], sizes = [1, 8, 8], strides = [1, 1, 1]} : vector<1x8x32xf32> to vector<1x8x8xf32>
    %35 = vector.extract_strided_slice %31 {offsets = [0, 0, 24], sizes = [1, 8, 8], strides = [1, 1, 1]} : vector<1x8x32xf32> to vector<1x8x8xf32>
    %36 = tpu.concatenate %32, %33, %34, %35 in 0 : vector<1x8x8xf32>, vector<1x8x8xf32>, vector<1x8x8xf32>, vector<1x8x8xf32> -> vector<4x8x8xf32>
    %37 = arith.truncf %36 : vector<4x8x8xf32> to vector<4x8x8xbf16>
    %38 = tpu.iota {dimensions = array<i32: 0>} : vector<8x8xi32>
    %39 = tpu.iota {dimensions = array<i32: 1>} : vector<8x8xi32>
    %40 = arith.cmpi sge, %38, %39 : vector<8x8xi32>
    %cst_9 = arith.constant 0.000000e+00 : f32
    %cst_10 = arith.constant -1.000000e+30 : f32
    %41 = vector.broadcast %cst_9 : f32 to vector<8x8xf32>
    %42 = vector.broadcast %cst_10 : f32 to vector<8x8xf32>
    %43 = arith.select %40, %41, %42 : vector<8x8xi1>, vector<8x8xf32>
    "tpu.trace_start"() <{level = 10 : i32, message = "xqd,xkd->xqk"}> : () -> ()
    %cst_11 = arith.constant dense<0.000000e+00> : vector<4x8x8xf32>
    %44 = tpu.matmul %23, %30, %cst_11 {dimension_numbers = #tpu.dot_dimension_numbers<[2], [2], [1], [1], [0, 0, 0, 1, 1, 1], [0], [0]>} : vector<4x8x8xbf16>, vector<4x8x8xbf16>, vector<4x8x8xf32> -> vector<4x8x8xf32>
    "tpu.trace_stop"() : () -> ()
    %45 = vector.shape_cast %43 : vector<8x8xf32> to vector<1x8x8xf32>
    %46 = vector.broadcast %45 : vector<1x8x8xf32> to vector<4x8x8xf32>
    %47 = arith.addf %44, %46 : vector<4x8x8xf32>
    %cst_12 = arith.constant dense<0xFF800000> : vector<4x8xf32>
    %48 = vector.multi_reduction <maximumf>, %47, %cst_12 [2] : vector<4x8x8xf32> to vector<4x8xf32>
    %49 = vector.shape_cast %48 : vector<4x8xf32> to vector<4x8x1xf32>
    %50 = vector.broadcast %49 : vector<4x8x1xf32> to vector<4x8x8xf32>
    %51 = arith.subf %47, %50 : vector<4x8x8xf32>
    %52 = math.exp %51 : vector<4x8x8xf32>
    %cst_13 = arith.constant dense<0.000000e+00> : vector<4x8xf32>
    %53 = vector.multi_reduction <add>, %52, %cst_13 [2] : vector<4x8x8xf32> to vector<4x8xf32>
    %54 = vector.shape_cast %53 : vector<4x8xf32> to vector<4x8x1xf32>
    %55 = tpu.reciprocal %54 {approx = true} : vector<4x8x1xf32> -> vector<4x8x1xf32>
    %56 = vector.broadcast %55 : vector<4x8x1xf32> to vector<4x8x8xf32>
    %57 = arith.mulf %52, %56 : vector<4x8x8xf32>
    %58 = arith.truncf %57 : vector<4x8x8xf32> to vector<4x8x8xbf16>
    "tpu.trace_start"() <{level = 10 : i32, message = "xqk,xkd->xqd"}> : () -> ()
    %cst_14 = arith.constant dense<0.000000e+00> : vector<4x8x8xf32>
    %59 = tpu.matmul %58, %37, %cst_14 {dimension_numbers = #tpu.dot_dimension_numbers<[2], [1], [1], [2], [0, 0, 0, 1, 1, 2], [0], [0]>} : vector<4x8x8xbf16>, vector<4x8x8xbf16>, vector<4x8x8xf32> -> vector<4x8x8xf32>
    "tpu.trace_stop"() : () -> ()
    %60 = vector.extract_strided_slice %59 {offsets = [0, 0, 0], sizes = [1, 8, 8], strides = [1, 1, 1]} : vector<4x8x8xf32> to vector<1x8x8xf32>
    %61 = vector.extract_strided_slice %59 {offsets = [1, 0, 0], sizes = [1, 8, 8], strides = [1, 1, 1]} : vector<4x8x8xf32> to vector<1x8x8xf32>
    %62 = vector.extract_strided_slice %59 {offsets = [2, 0, 0], sizes = [1, 8, 8], strides = [1, 1, 1]} : vector<4x8x8xf32> to vector<1x8x8xf32>
    %63 = vector.extract_strided_slice %59 {offsets = [3, 0, 0], sizes = [1, 8, 8], strides = [1, 1, 1]} : vector<4x8x8xf32> to vector<1x8x8xf32>
    %64 = tpu.concatenate %60, %61, %62, %63 in 2 : vector<1x8x8xf32>, vector<1x8x8xf32>, vector<1x8x8xf32>, vector<1x8x8xf32> -> vector<1x8x32xf32>
    %65 = vector.shape_cast %64 : vector<1x8x32xf32> to vector<8x32xf32>
    %66 = arith.truncf %65 : vector<8x32xf32> to vector<8x32xbf16>
    %c0_15 = arith.constant 0 : index
    %c0_16 = arith.constant 0 : index
    %c0_17 = arith.constant 0 : index
    %67 = vector.load %arg5[%c0_15, %c0_16, %c0_17] : memref<1x32x32xbf16, #tpu.memory_space<vmem>>, vector<1x32x32xbf16>
    %68 = vector.shape_cast %67 : vector<1x32x32xbf16> to vector<32x32xbf16>
    %cst_18 = arith.constant dense<0.000000e+00> : vector<8x32xf32>
    %69 = tpu.matmul %66, %68, %cst_18 {dimension_numbers = #tpu.dot_dimension_numbers<[1], [0], [0], [1], [0, 0, 1, 1], [], []>} : vector<8x32xbf16>, vector<32x32xbf16>, vector<8x32xf32> -> vector<8x32xf32>
    %c0_19 = arith.constant 0 : index
    %c0_20 = arith.constant 0 : index
    %c0_21 = arith.constant 0 : index
    %70 = vector.load %arg6[%c0_19, %c0_20, %c0_21] : memref<1x1x32xf32, #tpu.memory_space<vmem>>, vector<1x1x32xf32>
    %71 = vector.shape_cast %70 : vector<1x1x32xf32> to vector<1x32xf32>
    %72 = vector.broadcast %71 : vector<1x32xf32> to vector<8x32xf32>
    %73 = arith.addf %69, %72 : vector<8x32xf32>
    %74 = arith.addf %4, %73 : vector<8x32xf32>
    %c0_22 = arith.constant 0 : index
    %c0_23 = arith.constant 0 : index
    %c0_24 = arith.constant 0 : index
    %75 = vector.load %arg7[%c0_22, %c0_23, %c0_24] : memref<1x1x32xf32, #tpu.memory_space<vmem>>, vector<1x1x32xf32>
    %76 = vector.shape_cast %75 : vector<1x1x32xf32> to vector<1x32xf32>
    %c0_25 = arith.constant 0 : index
    %c0_26 = arith.constant 0 : index
    %c0_27 = arith.constant 0 : index
    %77 = vector.load %arg8[%c0_25, %c0_26, %c0_27] : memref<1x1x32xf32, #tpu.memory_space<vmem>>, vector<1x1x32xf32>
    %78 = vector.shape_cast %77 : vector<1x1x32xf32> to vector<1x32xf32>
    %cst_28 = arith.constant dense<0.000000e+00> : vector<8xf32>
    %79 = vector.multi_reduction <add>, %74, %cst_28 [1] : vector<8x32xf32> to vector<8xf32>
    %80 = vector.shape_cast %79 : vector<8xf32> to vector<8x1xf32>
    %cst_29 = arith.constant 3.200000e+01 : f32
    %81 = vector.broadcast %cst_29 : f32 to vector<8x1xf32>
    %82 = arith.divf %80, %81 : vector<8x1xf32>
    %83 = vector.broadcast %82 : vector<8x1xf32> to vector<8x32xf32>
    %84 = arith.subf %74, %83 : vector<8x32xf32>
    %85 = arith.mulf %84, %84 : vector<8x32xf32>
    %cst_30 = arith.constant dense<0.000000e+00> : vector<8xf32>
    %86 = vector.multi_reduction <add>, %85, %cst_30 [1] : vector<8x32xf32> to vector<8xf32>
    %87 = vector.shape_cast %86 : vector<8xf32> to vector<8x1xf32>
    %cst_31 = arith.constant 3.200000e+01 : f32
    %88 = vector.broadcast %cst_31 : f32 to vector<8x1xf32>
    %89 = arith.divf %87, %88 : vector<8x1xf32>
    %90 = vector.broadcast %82 : vector<8x1xf32> to vector<8x32xf32>
    %91 = arith.subf %74, %90 : vector<8x32xf32>
    %cst_32 = arith.constant 9.99999974E-6 : f32
    %92 = vector.broadcast %cst_32 : f32 to vector<8x1xf32>
    %93 = arith.addf %89, %92 : vector<8x1xf32>
    %94 = math.rsqrt %93 : vector<8x1xf32>
    %95 = vector.broadcast %94 : vector<8x1xf32> to vector<8x32xf32>
    %96 = arith.mulf %91, %95 : vector<8x32xf32>
    %97 = vector.broadcast %76 : vector<1x32xf32> to vector<8x32xf32>
    %98 = arith.mulf %96, %97 : vector<8x32xf32>
    %99 = vector.broadcast %78 : vector<1x32xf32> to vector<8x32xf32>
    %100 = arith.addf %98, %99 : vector<8x32xf32>
    %101 = arith.truncf %100 : vector<8x32xf32> to vector<8x32xbf16>
    %c0_33 = arith.constant 0 : index
    %c0_34 = arith.constant 0 : index
    %c0_35 = arith.constant 0 : index
    %102 = vector.load %arg9[%c0_33, %c0_34, %c0_35] : memref<1x32x32xbf16, #tpu.memory_space<vmem>>, vector<1x32x32xbf16>
    %103 = vector.shape_cast %102 : vector<1x32x32xbf16> to vector<32x32xbf16>
    %cst_36 = arith.constant dense<0.000000e+00> : vector<8x32xf32>
    %104 = tpu.matmul %101, %103, %cst_36 {dimension_numbers = #tpu.dot_dimension_numbers<[1], [0], [0], [1], [0, 0, 1, 1], [], []>} : vector<8x32xbf16>, vector<32x32xbf16>, vector<8x32xf32> -> vector<8x32xf32>
    %c0_37 = arith.constant 0 : index
    %c0_38 = arith.constant 0 : index
    %c0_39 = arith.constant 0 : index
    %105 = vector.load %arg10[%c0_37, %c0_38, %c0_39] : memref<1x1x32xf32, #tpu.memory_space<vmem>>, vector<1x1x32xf32>
    %106 = vector.shape_cast %105 : vector<1x1x32xf32> to vector<1x32xf32>
    %107 = vector.broadcast %106 : vector<1x32xf32> to vector<8x32xf32>
    %108 = arith.addf %104, %107 : vector<8x32xf32>
    %cst_40 = arith.constant 0.000000e+00 : f32
    %109 = vector.broadcast %cst_40 : f32 to vector<8x32xf32>
    %110 = arith.maximumf %108, %109 : vector<8x32xf32>
    %111 = arith.truncf %110 : vector<8x32xf32> to vector<8x32xbf16>
    %c0_41 = arith.constant 0 : index
    %c0_42 = arith.constant 0 : index
    %c0_43 = arith.constant 0 : index
    %112 = vector.load %arg11[%c0_41, %c0_42, %c0_43] : memref<1x32x32xbf16, #tpu.memory_space<vmem>>, vector<1x32x32xbf16>
    %113 = vector.shape_cast %112 : vector<1x32x32xbf16> to vector<32x32xbf16>
    %cst_44 = arith.constant dense<0.000000e+00> : vector<8x32xf32>
    %114 = tpu.matmul %111, %113, %cst_44 {dimension_numbers = #tpu.dot_dimension_numbers<[1], [0], [0], [1], [0, 0, 1, 1], [], []>} : vector<8x32xbf16>, vector<32x32xbf16>, vector<8x32xf32> -> vector<8x32xf32>
    %c0_45 = arith.constant 0 : index
    %c0_46 = arith.constant 0 : index
    %c0_47 = arith.constant 0 : index
    %115 = vector.load %arg12[%c0_45, %c0_46, %c0_47] : memref<1x1x32xf32, #tpu.memory_space<vmem>>, vector<1x1x32xf32>
    %116 = vector.shape_cast %115 : vector<1x1x32xf32> to vector<1x32xf32>
    %117 = vector.broadcast %116 : vector<1x32xf32> to vector<8x32xf32>
    %118 = arith.addf %114, %117 : vector<8x32xf32>
    %119 = arith.addf %100, %118 : vector<8x32xf32>
    %c0_48 = arith.constant 0 : index
    %c0_49 = arith.constant 0 : index
    %c0_50 = arith.constant 0 : index
    %120 = vector.load %arg13[%c0_48, %c0_49, %c0_50] : memref<1x1x32xf32, #tpu.memory_space<vmem>>, vector<1x1x32xf32>
    %121 = vector.shape_cast %120 : vector<1x1x32xf32> to vector<1x32xf32>
    %c0_51 = arith.constant 0 : index
    %c0_52 = arith.constant 0 : index
    %c0_53 = arith.constant 0 : index
    %122 = vector.load %arg14[%c0_51, %c0_52, %c0_53] : memref<1x1x32xf32, #tpu.memory_space<vmem>>, vector<1x1x32xf32>
    %123 = vector.shape_cast %122 : vector<1x1x32xf32> to vector<1x32xf32>
    %cst_54 = arith.constant dense<0.000000e+00> : vector<8xf32>
    %124 = vector.multi_reduction <add>, %119, %cst_54 [1] : vector<8x32xf32> to vector<8xf32>
    %125 = vector.shape_cast %124 : vector<8xf32> to vector<8x1xf32>
    %cst_55 = arith.constant 3.200000e+01 : f32
    %126 = vector.broadcast %cst_55 : f32 to vector<8x1xf32>
    %127 = arith.divf %125, %126 : vector<8x1xf32>
    %128 = vector.broadcast %127 : vector<8x1xf32> to vector<8x32xf32>
    %129 = arith.subf %119, %128 : vector<8x32xf32>
    %130 = arith.mulf %129, %129 : vector<8x32xf32>
    %cst_56 = arith.constant dense<0.000000e+00> : vector<8xf32>
    %131 = vector.multi_reduction <add>, %130, %cst_56 [1] : vector<8x32xf32> to vector<8xf32>
    %132 = vector.shape_cast %131 : vector<8xf32> to vector<8x1xf32>
    %cst_57 = arith.constant 3.200000e+01 : f32
    %133 = vector.broadcast %cst_57 : f32 to vector<8x1xf32>
    %134 = arith.divf %132, %133 : vector<8x1xf32>
    %135 = vector.broadcast %127 : vector<8x1xf32> to vector<8x32xf32>
    %136 = arith.subf %119, %135 : vector<8x32xf32>
    %cst_58 = arith.constant 9.99999974E-6 : f32
    %137 = vector.broadcast %cst_58 : f32 to vector<8x1xf32>
    %138 = arith.addf %134, %137 : vector<8x1xf32>
    %139 = math.rsqrt %138 : vector<8x1xf32>
    %140 = vector.broadcast %139 : vector<8x1xf32> to vector<8x32xf32>
    %141 = arith.mulf %136, %140 : vector<8x32xf32>
    %142 = vector.broadcast %121 : vector<1x32xf32> to vector<8x32xf32>
    %143 = arith.mulf %141, %142 : vector<8x32xf32>
    %144 = vector.broadcast %123 : vector<1x32xf32> to vector<8x32xf32>
    %145 = arith.addf %143, %144 : vector<8x32xf32>
    %146 = arith.truncf %145 : vector<8x32xf32> to vector<8x32xbf16>
    %c0_59 = arith.constant 0 : index
    %c0_60 = arith.constant 0 : index
    %147 = vector.load %arg16[%c0_59, %c0_60] : memref<8x32xbf16, #tpu.memory_space<vmem>>, vector<8x32xbf16>
    tpu.vector_store %arg16[%c0_59, %c0_60], %146 {strides = array<i32>} : memref<8x32xbf16, #tpu.memory_space<vmem>>, vector<8x32xbf16>,
    %c0_61 = arith.constant 0 : index
    %c0_62 = arith.constant 0 : index
    %148 = vector.load %arg15[%c0_61, %c0_62] : memref<8x32xf32, #tpu.memory_space<vmem>>, vector<8x32xf32>
    tpu.vector_store %arg15[%c0_61, %c0_62], %145 {strides = array<i32>} : memref<8x32xf32, #tpu.memory_space<vmem>>, vector<8x32xf32>,
    return
  }
  func.func @transform_0(%arg0: i32, %arg1: i32) -> (i32, i32) {
    %c0_i32 = arith.constant 0 : i32
    %c0_i32_0 = arith.constant 0 : i32
    return %arg0, %c0_i32 : i32, i32
  }
  func.func @transform_1(%arg0: i32, %arg1: i32) -> (i32, i32, i32) {
    %c0_i32 = arith.constant 0 : i32
    %c0_i32_0 = arith.constant 0 : i32
    %c0_i32_1 = arith.constant 0 : i32
    return %arg1, %c0_i32, %c0_i32_0 : i32, i32, i32
  }
  func.func @transform_2(%arg0: i32, %arg1: i32) -> (i32, i32, i32) {
    %c0_i32 = arith.constant 0 : i32
    %c0_i32_0 = arith.constant 0 : i32
    %c0_i32_1 = arith.constant 0 : i32
    return %arg1, %c0_i32, %c0_i32_0 : i32, i32, i32
  }
  func.func @transform_3(%arg0: i32, %arg1: i32) -> (i32, i32, i32) {
    %c0_i32 = arith.constant 0 : i32
    %c0_i32_0 = arith.constant 0 : i32
    %c0_i32_1 = arith.constant 0 : i32
    return %arg1, %c0_i32, %c0_i32_0 : i32, i32, i32
  }
  func.func @transform_4(%arg0: i32, %arg1: i32) -> (i32, i32, i32) {
    %c0_i32 = arith.constant 0 : i32
    %c0_i32_0 = arith.constant 0 : i32
    %c0_i32_1 = arith.constant 0 : i32
    return %arg1, %c0_i32, %c0_i32_0 : i32, i32, i32
  }
  func.func @transform_5(%arg0: i32, %arg1: i32) -> (i32, i32, i32) {
    %c0_i32 = arith.constant 0 : i32
    %c0_i32_0 = arith.constant 0 : i32
    %c0_i32_1 = arith.constant 0 : i32
    return %arg1, %c0_i32, %c0_i32_0 : i32, i32, i32
  }
  func.func @transform_6(%arg0: i32, %arg1: i32) -> (i32, i32, i32) {
    %c0_i32 = arith.constant 0 : i32
    %c0_i32_0 = arith.constant 0 : i32
    %c0_i32_1 = arith.constant 0 : i32
    return %arg1, %c0_i32, %c0_i32_0 : i32, i32, i32
  }
  func.func @transform_7(%arg0: i32, %arg1: i32) -> (i32, i32, i32) {
    %c0_i32 = arith.constant 0 : i32
    %c0_i32_0 = arith.constant 0 : i32
    %c0_i32_1 = arith.constant 0 : i32
    return %arg1, %c0_i32, %c0_i32_0 : i32, i32, i32
  }
  func.func @transform_8(%arg0: i32, %arg1: i32) -> (i32, i32, i32) {
    %c0_i32 = arith.constant 0 : i32
    %c0_i32_0 = arith.constant 0 : i32
    %c0_i32_1 = arith.constant 0 : i32
    return %arg1, %c0_i32, %c0_i32_0 : i32, i32, i32
  }
  func.func @transform_9(%arg0: i32, %arg1: i32) -> (i32, i32, i32) {
    %c0_i32 = arith.constant 0 : i32
    %c0_i32_0 = arith.constant 0 : i32
    %c0_i32_1 = arith.constant 0 : i32
    return %arg1, %c0_i32, %c0_i32_0 : i32, i32, i32
  }
  func.func @transform_10(%arg0: i32, %arg1: i32) -> (i32, i32, i32) {
    %c0_i32 = arith.constant 0 : i32
    %c0_i32_0 = arith.constant 0 : i32
    %c0_i32_1 = arith.constant 0 : i32
    return %arg1, %c0_i32, %c0_i32_0 : i32, i32, i32
  }
  func.func @transform_11(%arg0: i32, %arg1: i32) -> (i32, i32, i32) {
    %c0_i32 = arith.constant 0 : i32
    %c0_i32_0 = arith.constant 0 : i32
    %c0_i32_1 = arith.constant 0 : i32
    return %arg1, %c0_i32, %c0_i32_0 : i32, i32, i32
  }
  func.func @transform_12(%arg0: i32, %arg1: i32) -> (i32, i32, i32) {
    %c0_i32 = arith.constant 0 : i32
    %c0_i32_0 = arith.constant 0 : i32
    %c0_i32_1 = arith.constant 0 : i32
    return %arg1, %c0_i32, %c0_i32_0 : i32, i32, i32
  }
  func.func @transform_13(%arg0: i32, %arg1: i32) -> (i32, i32) {
    %c0_i32 = arith.constant 0 : i32
    %c0_i32_0 = arith.constant 0 : i32
    return %arg0, %c0_i32 : i32, i32
  }
}

</mosaic_0001>

<llo_original>
// kernel: tpu_custom_call.1
$region0: #{tpu_custom_call.1}
  #allocation0 [shape = 'u32[]', space=smem, size = 0x4, offset = 0x4, fixed_abs, tag = 'smem constant byte address 0x4 - core index']
  #allocation1 [shape = 'u32[144,128]{1,0:T(1,128)}', space=vmem, size = 0x12000, scoped, tag = 'internal scratch']
  #allocation2 [shape = 'bf16[8,32]{1,0:T(8,128)(2,1)}', space=vmem, size = 0x800, scoped, tag = 'scratch operand']
  %s0 = inlined_call_operand.hbm [shape: f32[16,32], index: 0, kind: input, shape index: {}]
  %s1 = inlined_call_operand.hbm [shape: bf16[2,32,96], index: 1, kind: input, shape index: {}]
  %s2 = inlined_call_operand.vmem [shape: f32[2,1,96], index: 2, kind: input, shape index: {}]
  %s3 = inlined_call_operand.hbm [shape: bf16[2,32,32], index: 3, kind: input, shape index: {}]
  %s4 = inlined_call_operand.hbm [shape: f32[2,1,32], index: 4, kind: input, shape index: {}]
  %s5 = inlined_call_operand.hbm [shape: f32[2,1,32], index: 5, kind: input, shape index: {}]
  %s6 = inlined_call_operand.hbm [shape: f32[2,1,32], index: 6, kind: input, shape index: {}]
  %s7 = inlined_call_operand.hbm [shape: bf16[2,32,32], index: 7, kind: input, shape index: {}]
  %s8 = inlined_call_operand.hbm [shape: f32[2,1,32], index: 8, kind: input, shape index: {}]
  %s9 = inlined_call_operand.vmem [shape: bf16[2,32,32], index: 9, kind: input, shape index: {}]
  %s10 = inlined_call_operand.vmem [shape: f32[2,1,32], index: 10, kind: input, shape index: {}]
  %s11 = inlined_call_operand.vmem [shape: f32[2,1,32], index: 11, kind: input, shape index: {}]
  %s12 = inlined_call_operand.vmem [shape: f32[2,1,32], index: 12, kind: input, shape index: {}]
  %s13 = inlined_call_operand.hbm [shape: f32[16,32], index: 13, kind: output, shape index: {}]
  %s14 = sld [smem:[#allocation0]]
  $region121: #{tpu_custom_call.1} parent=0
    _
  %s16 = ssub.s32 1, %s14
  %s17 = scalar_select 0, %s16, %s14
  $region1: #{tpu_custom_call.1} parent=0
    #allocation3 [shape = 'u8[8192]{0}', space=vmem, size = 0x2000, scoped, tag = 'input window, operand 0']
    #allocation4 [shape = 's32[2]{0}', space=sflag, size = 0x8, scoped, tag = 'scoped memory for tpu_custom_call.1']
    #allocation5 [shape = 's32[2]{0}', space=sflag, size = 0x8, scoped, tag = 'scoped memory for tpu_custom_call.1']
    #allocation6 [shape = 'u8[16384]{0}', space=vmem, size = 0x4000, scoped, tag = 'input window, operand 1']
    #allocation7 [shape = 's32[2]{0}', space=sflag, size = 0x8, scoped, tag = 'scoped memory for tpu_custom_call.1']
    #allocation8 [shape = 'u8[16384]{0}', space=vmem, size = 0x4000, scoped, tag = 'input window, operand 3']
    #allocation9 [shape = 'u8[1024]{0}', space=vmem, size = 0x400, scoped, tag = 'input window, operand 4']
    #allocation10 [shape = 's32[2]{0}', space=sflag, size = 0x8, scoped, tag = 'scoped memory for tpu_custom_call.1']
    #allocation11 [shape = 'u8[1024]{0}', space=vmem, size = 0x400, scoped, tag = 'input window, operand 5']
    #allocation12 [shape = 'u8[1024]{0}', space=vmem, size = 0x400, scoped, tag = 'input window, operand 6']
    #allocation13 [shape = 's32[2]{0}', space=sflag, size = 0x8, scoped, tag = 'scoped memory for tpu_custom_call.1']
    #allocation14 [shape = 'u8[16384]{0}', space=vmem, size = 0x4000, scoped, tag = 'input window, operand 7']
    #allocation15 [shape = 'u8[1024]{0}', space=vmem, size = 0x400, scoped, tag = 'input window, operand 8']
    #allocation16 [shape = 's32[2]{0}', space=sflag, size = 0x8, scoped, tag = 'scoped memory for tpu_custom_call.1']
    #allocation17 [shape = 'u8[8192]{0}', space=vmem, size = 0x2000, scoped, tag = 'output window, operand 0']
    %18 = vsyncpa [#allocation4], 0
    %s19 = scalar_lea.sflag [#allocation4], 1
    %20 = vsyncpa %s19, 0
    %21 = vsyncpa [#allocation7], 0
    %s22 = scalar_lea.sflag [#allocation7], 1
    %23 = vsyncpa %s22, 0
    %24 = vsyncpa [#allocation10], 0
    %s25 = scalar_lea.sflag [#allocation10], 1
    %26 = vsyncpa %s25, 0
    %27 = vsyncpa [#allocation13], 0
    %s28 = scalar_lea.sflag [#allocation13], 1
    %29 = vsyncpa %s28, 0
    %30 = vsyncpa [#allocation16], 0
    %s31 = scalar_lea.sflag [#allocation16], 1
    %32 = vsyncpa %s31, 0
    %33 = vsyncpa [#allocation5], 0
    %s34 = scalar_lea.sflag [#allocation5], 1
    %35 = vsyncpa %s34, 0
    loop: start=0, step=1, limit=6
    $region2: #{tpu_custom_call.1} parent=1 // loop_pre_header
      _
    $region3: #{tpu_custom_call.1} parent=1 // loop_header
      %s37 = sphi 0, %s41
      %p38 = scmp.ge.s32.totalorder %s37, 6
      %s44 = sphi 0, %s56
      %s45 = sphi 0, %s52
      %s46 = sphi 0, %s44
      %s47 = sphi 0, %s45
      %s48 = sphi 0, %s46
      %s49 = sphi 0, %s47
      %s59 = sphi 0, %s61
      %s62 = sphi 0, %s59
      %s63 = sphi 0, %s62
      %s79 = sphi 0, %s63
      %s85 = sphi 0, %s87
      %s88 = sphi 0, %s85
      %s89 = sphi 0, %s88
      %s105 = sphi 0, %s89
      %s111 = sphi 0, %s113
      %s114 = sphi 0, %s111
      %s115 = sphi 0, %s114
      %s131 = sphi 0, %s115
      %s137 = sphi 0, %s139
      %s140 = sphi 0, %s137
      %s141 = sphi 0, %s140
      %s157 = sphi 0, %s141
      %s163 = sphi 0, %s165
      %s166 = sphi 0, %s163
      %s167 = sphi 0, %s166
      %s183 = sphi 0, %s167
      %s189 = sphi 0, %s191
      %s192 = sphi 0, %s189
      %s193 = sphi 0, %s192
      %s209 = sphi 0, %s193
      %s215 = sphi 0, %s217
      %s218 = sphi 0, %s215
      %s219 = sphi 0, %s218
      %s235 = sphi 0, %s219
      %s241 = sphi 0, %s243
      %s244 = sphi 0, %s241
      %s245 = sphi 0, %s244
      %s261 = sphi 0, %s245
      %s267 = sphi 0, %s269
      %s270 = sphi 0, %s267
      %s271 = sphi 0, %s270
      %s287 = sphi 0, %s271
      %s293 = sphi 0, %s295
      %s296 = sphi 0, %s293
      %s297 = sphi 0, %s296
      %s313 = sphi 0, %s297
      %s319 = sphi 0, %s321
      %s322 = sphi 0, %s319
      %s323 = sphi 0, %s322
      %s339 = sphi 0, %s323
      %s345 = sphi 0, %s347
      %s348 = sphi 0, %s345
      %s349 = sphi 0, %s348
      %s365 = sphi 0, %s349
      %s371 = sphi 0, %s373
      %s374 = sphi 0, %s371
      %s375 = sphi 0, %s374
      %s391 = sphi 0, %s375
      %s397 = sphi 0, %s399
      %s400 = sphi 0, %s397
      %s401 = sphi 0, %s400
      %s417 = sphi 0, %s401
    $region4: #{tpu_custom_call.1} parent=1 // loop_header_branch
      %40 = sbr.rel (%p38) target = $region8
    $region5: #{tpu_custom_call.1} parent=1 // loop_body
      %s42 = ssub.s32 %s37, 1
      %s43 = ssub.s32 %s37, 2
      %s50 = sadd.s32 1, %s45
      %p51 = scmp.ge.s32.totalorder %s50, 2
      %s52 = scalar_select %p51, 0, %s50
      %s53 = sadd.s32 1, %s44
      %s54 = scalar_select %p51, %s53, %s44
      %p55 = scmp.ge.s32.totalorder %s54, 2
      %s56 = scalar_select %p55, 0, %s54
      %s57 = ssub.s32 %s44, %s56
      %p58 = scmp.eq.s32.totalorder %s57, 0
      %s60 = sadd.s32 %s59, 1
      %s61 = scalar_select %p58, %s59, %s60
      %p64 = pneg %p58
      %p65 = scmp.eq.s32.totalorder %s37, 3
      %p66 = por %p64, %p65
      %p67 = scmp.ne.s32.totalorder %s59, %s62
      %p68 = scmp.eq.s32.totalorder %s37, 0
      %p69 = por %p67, %p68
      %p70 = scmp.ne.s32.totalorder %s59, %s62
      %p71 = scmp.eq.s32.totalorder %s42, 3
      %p72 = por %p70, %p71
      %p73 = scmp.ne.s32.totalorder %s62, %s63
      %p74 = scmp.eq.s32.totalorder %s42, 0
      %p75 = por %p73, %p74
      %p76 = scmp.ne.s32.totalorder %s62, %s63
      %p77 = scmp.eq.s32.totalorder %s43, 3
      %p78 = por %p76, %p77
      %p80 = scmp.ne.s32.totalorder %s63, %s79
      %p81 = scmp.eq.s32.totalorder %s43, 0
      %p82 = por %p80, %p81
      %s83 = ssub.s32 %s45, %s52
      %p84 = scmp.eq.s32.totalorder %s83, 0
      %s86 = sadd.s32 %s85, 1
      %s87 = scalar_select %p84, %s85, %s86
      %p90 = pneg %p84
      %p91 = scmp.eq.s32.totalorder %s37, 3
      %p92 = por %p90, %p91
      %p93 = scmp.ne.s32.totalorder %s85, %s88
      %p94 = scmp.eq.s32.totalorder %s37, 0
      %p95 = por %p93, %p94
      %p96 = scmp.ne.s32.totalorder %s85, %s88
      %p97 = scmp.eq.s32.totalorder %s42, 3
      %p98 = por %p96, %p97
      %p99 = scmp.ne.s32.totalorder %s88, %s89
      %p100 = scmp.eq.s32.totalorder %s42, 0
      %p101 = por %p99, %p100
      %p102 = scmp.ne.s32.totalorder %s88, %s89
      %p103 = scmp.eq.s32.totalorder %s43, 3
      %p104 = por %p102, %p103
      %p106 = scmp.ne.s32.totalorder %s89, %s105
      %p107 = scmp.eq.s32.totalorder %s43, 0
      %p108 = por %p106, %p107
      %s109 = ssub.s32 %s45, %s52
      %p110 = scmp.eq.s32.totalorder %s109, 0
      %s112 = sadd.s32 %s111, 1
      %s113 = scalar_select %p110, %s111, %s112
      %p116 = pneg %p110
      %p117 = scmp.eq.s32.totalorder %s37, 3
      %p118 = por %p116, %p117
      %p119 = scmp.ne.s32.totalorder %s111, %s114
      %p120 = scmp.eq.s32.totalorder %s37, 0
      %p121 = por %p119, %p120
      %p122 = scmp.ne.s32.totalorder %s111, %s114
      %p123 = scmp.eq.s32.totalorder %s42, 3
      %p124 = por %p122, %p123
      %p125 = scmp.ne.s32.totalorder %s114, %s115
      %p126 = scmp.eq.s32.totalorder %s42, 0
      %p127 = por %p125, %p126
      %p128 = scmp.ne.s32.totalorder %s114, %s115
      %p129 = scmp.eq.s32.totalorder %s43, 3
      %p130 = por %p128, %p129
      %p132 = scmp.ne.s32.totalorder %s115, %s131
      %p133 = scmp.eq.s32.totalorder %s43, 0
      %p134 = por %p132, %p133
      %s135 = ssub.s32 %s45, %s52
      %p136 = scmp.eq.s32.totalorder %s135, 0
      %s138 = sadd.s32 %s137, 1
      %s139 = scalar_select %p136, %s137, %s138
      %p142 = pneg %p136
      %p143 = scmp.eq.s32.totalorder %s37, 3
      %p144 = por %p142, %p143
      %p145 = scmp.ne.s32.totalorder %s137, %s140
      %p146 = scmp.eq.s32.totalorder %s37, 0
      %p147 = por %p145, %p146
      %p148 = scmp.ne.s32.totalorder %s137, %s140
      %p149 = scmp.eq.s32.totalorder %s42, 3
      %p150 = por %p148, %p149
      %p151 = scmp.ne.s32.totalorder %s140, %s141
      %p152 = scmp.eq.s32.totalorder %s42, 0
      %p153 = por %p151, %p152
      %p154 = scmp.ne.s32.totalorder %s140, %s141
      %p155 = scmp.eq.s32.totalorder %s43, 3
      %p156 = por %p154, %p155
      %p158 = scmp.ne.s32.totalorder %s141, %s157
      %p159 = scmp.eq.s32.totalorder %s43, 0
      %p160 = por %p158, %p159
      %s161 = ssub.s32 %s45, %s52
      %p162 = scmp.eq.s32.totalorder %s161, 0
      %s164 = sadd.s32 %s163, 1
      %s165 = scalar_select %p162, %s163, %s164
      %p168 = pneg %p162
      %p169 = scmp.eq.s32.totalorder %s37, 3
      %p170 = por %p168, %p169
      %p171 = scmp.ne.s32.totalorder %s163, %s166
      %p172 = scmp.eq.s32.totalorder %s37, 0
      %p173 = por %p171, %p172
      %p174 = scmp.ne.s32.totalorder %s163, %s166
      %p175 = scmp.eq.s32.totalorder %s42, 3
      %p176 = por %p174, %p175
      %p177 = scmp.ne.s32.totalorder %s166, %s167
      %p178 = scmp.eq.s32.totalorder %s42, 0
      %p179 = por %p177, %p178
      %p180 = scmp.ne.s32.totalorder %s166, %s167
      %p181 = scmp.eq.s32.totalorder %s43, 3
      %p182 = por %p180, %p181
      %p184 = scmp.ne.s32.totalorder %s167, %s183
      %p185 = scmp.eq.s32.totalorder %s43, 0
      %p186 = por %p184, %p185
      %s187 = ssub.s32 %s45, %s52
      %p188 = scmp.eq.s32.totalorder %s187, 0
      %s190 = sadd.s32 %s189, 1
      %s191 = scalar_select %p188, %s189, %s190
      %p194 = pneg %p188
      %p195 = scmp.eq.s32.totalorder %s37, 3
      %p196 = por %p194, %p195
      %p197 = scmp.ne.s32.totalorder %s189, %s192
      %p198 = scmp.eq.s32.totalorder %s37, 0
      %p199 = por %p197, %p198
      %p200 = scmp.ne.s32.totalorder %s189, %s192
      %p201 = scmp.eq.s32.totalorder %s42, 3
      %p202 = por %p200, %p201
      %p203 = scmp.ne.s32.totalorder %s192, %s193
      %p204 = scmp.eq.s32.totalorder %s42, 0
      %p205 = por %p203, %p204
      %p206 = scmp.ne.s32.totalorder %s192, %s193
      %p207 = scmp.eq.s32.totalorder %s43, 3
      %p208 = por %p206, %p207
      %p210 = scmp.ne.s32.totalorder %s193, %s209
      %p211 = scmp.eq.s32.totalorder %s43, 0
      %p212 = por %p210, %p211
      %s213 = ssub.s32 %s45, %s52
      %p214 = scmp.eq.s32.totalorder %s213, 0
      %s216 = sadd.s32 %s215, 1
      %s217 = scalar_select %p214, %s215, %s216
      %p220 = pneg %p214
      %p221 = scmp.eq.s32.totalorder %s37, 3
      %p222 = por %p220, %p221
      %p223 = scmp.ne.s32.totalorder %s215, %s218
      %p224 = scmp.eq.s32.totalorder %s37, 0
      %p225 = por %p223, %p224
      %p226 = scmp.ne.s32.totalorder %s215, %s218
      %p227 = scmp.eq.s32.totalorder %s42, 3
      %p228 = por %p226, %p227
      %p229 = scmp.ne.s32.totalorder %s218, %s219
      %p230 = scmp.eq.s32.totalorder %s42, 0
      %p231 = por %p229, %p230
      %p232 = scmp.ne.s32.totalorder %s218, %s219
      %p233 = scmp.eq.s32.totalorder %s43, 3
      %p234 = por %p232, %p233
      %p236 = scmp.ne.s32.totalorder %s219, %s235
      %p237 = scmp.eq.s32.totalorder %s43, 0
      %p238 = por %p236, %p237
      %s239 = ssub.s32 %s45, %s52
      %p240 = scmp.eq.s32.totalorder %s239, 0
      %s242 = sadd.s32 %s241, 1
      %s243 = scalar_select %p240, %s241, %s242
      %p246 = pneg %p240
      %p247 = scmp.eq.s32.totalorder %s37, 3
      %p248 = por %p246, %p247
      %p249 = scmp.ne.s32.totalorder %s241, %s244
      %p250 = scmp.eq.s32.totalorder %s37, 0
      %p251 = por %p249, %p250
      %p252 = scmp.ne.s32.totalorder %s241, %s244
      %p253 = scmp.eq.s32.totalorder %s42, 3
      %p254 = por %p252, %p253
      %p255 = scmp.ne.s32.totalorder %s244, %s245
      %p256 = scmp.eq.s32.totalorder %s42, 0
      %p257 = por %p255, %p256
      %p258 = scmp.ne.s32.totalorder %s244, %s245
      %p259 = scmp.eq.s32.totalorder %s43, 3
      %p260 = por %p258, %p259
      %p262 = scmp.ne.s32.totalorder %s245, %s261
      %p263 = scmp.eq.s32.totalorder %s43, 0
      %p264 = por %p262, %p263
      %s265 = ssub.s32 %s45, %s52
      %p266 = scmp.eq.s32.totalorder %s265, 0
      %s268 = sadd.s32 %s267, 1
      %s269 = scalar_select %p266, %s267, %s268
      %p272 = pneg %p266
      %p273 = scmp.eq.s32.totalorder %s37, 3
      %p274 = por %p272, %p273
      %p275 = scmp.ne.s32.totalorder %s267, %s270
      %p276 = scmp.eq.s32.totalorder %s37, 0
      %p277 = por %p275, %p276
      %p278 = scmp.ne.s32.totalorder %s267, %s270
      %p279 = scmp.eq.s32.totalorder %s42, 3
      %p280 = por %p278, %p279
      %p281 = scmp.ne.s32.totalorder %s270, %s271
      %p282 = scmp.eq.s32.totalorder %s42, 0
      %p283 = por %p281, %p282
      %p284 = scmp.ne.s32.totalorder %s270, %s271
      %p285 = scmp.eq.s32.totalorder %s43, 3
      %p286 = por %p284, %p285
      %p288 = scmp.ne.s32.totalorder %s271, %s287
      %p289 = scmp.eq.s32.totalorder %s43, 0
      %p290 = por %p288, %p289
      %s291 = ssub.s32 %s45, %s52
      %p292 = scmp.eq.s32.totalorder %s291, 0
      %s294 = sadd.s32 %s293, 1
      %s295 = scalar_select %p292, %s293, %s294
      %p298 = pneg %p292
      %p299 = scmp.eq.s32.totalorder %s37, 3
      %p300 = por %p298, %p299
      %p301 = scmp.ne.s32.totalorder %s293, %s296
      %p302 = scmp.eq.s32.totalorder %s37, 0
      %p303 = por %p301, %p302
      %p304 = scmp.ne.s32.totalorder %s293, %s296
      %p305 = scmp.eq.s32.totalorder %s42, 3
      %p306 = por %p304, %p305
      %p307 = scmp.ne.s32.totalorder %s296, %s297
      %p308 = scmp.eq.s32.totalorder %s42, 0
      %p309 = por %p307, %p308
      %p310 = scmp.ne.s32.totalorder %s296, %s297
      %p311 = scmp.eq.s32.totalorder %s43, 3
      %p312 = por %p310, %p311
      %p314 = scmp.ne.s32.totalorder %s297, %s313
      %p315 = scmp.eq.s32.totalorder %s43, 0
      %p316 = por %p314, %p315
      %s317 = ssub.s32 %s45, %s52
      %p318 = scmp.eq.s32.totalorder %s317, 0
      %s320 = sadd.s32 %s319, 1
      %s321 = scalar_select %p318, %s319, %s320
      %p324 = pneg %p318
      %p325 = scmp.eq.s32.totalorder %s37, 3
      %p326 = por %p324, %p325
      %p327 = scmp.ne.s32.totalorder %s319, %s322
      %p328 = scmp.eq.s32.totalorder %s37, 0
      %p329 = por %p327, %p328
      %p330 = scmp.ne.s32.totalorder %s319, %s322
      %p331 = scmp.eq.s32.totalorder %s42, 3
      %p332 = por %p330, %p331
      %p333 = scmp.ne.s32.totalorder %s322, %s323
      %p334 = scmp.eq.s32.totalorder %s42, 0
      %p335 = por %p333, %p334
      %p336 = scmp.ne.s32.totalorder %s322, %s323
      %p337 = scmp.eq.s32.totalorder %s43, 3
      %p338 = por %p336, %p337
      %p340 = scmp.ne.s32.totalorder %s323, %s339
      %p341 = scmp.eq.s32.totalorder %s43, 0
      %p342 = por %p340, %p341
      %s343 = ssub.s32 %s45, %s52
      %p344 = scmp.eq.s32.totalorder %s343, 0
      %s346 = sadd.s32 %s345, 1
      %s347 = scalar_select %p344, %s345, %s346
      %p350 = pneg %p344
      %p351 = scmp.eq.s32.totalorder %s37, 3
      %p352 = por %p350, %p351
      %p353 = scmp.ne.s32.totalorder %s345, %s348
      %p354 = scmp.eq.s32.totalorder %s37, 0
      %p355 = por %p353, %p354
      %p356 = scmp.ne.s32.totalorder %s345, %s348
      %p357 = scmp.eq.s32.totalorder %s42, 3
      %p358 = por %p356, %p357
      %p359 = scmp.ne.s32.totalorder %s348, %s349
      %p360 = scmp.eq.s32.totalorder %s42, 0
      %p361 = por %p359, %p360
      %p362 = scmp.ne.s32.totalorder %s348, %s349
      %p363 = scmp.eq.s32.totalorder %s43, 3
      %p364 = por %p362, %p363
      %p366 = scmp.ne.s32.totalorder %s349, %s365
      %p367 = scmp.eq.s32.totalorder %s43, 0
      %p368 = por %p366, %p367
      %s369 = ssub.s32 %s45, %s52
      %p370 = scmp.eq.s32.totalorder %s369, 0
      %s372 = sadd.s32 %s371, 1
      %s373 = scalar_select %p370, %s371, %s372
      %p376 = pneg %p370
      %p377 = scmp.eq.s32.totalorder %s37, 3
      %p378 = por %p376, %p377
      %p379 = scmp.ne.s32.totalorder %s371, %s374
      %p380 = scmp.eq.s32.totalorder %s37, 0
      %p381 = por %p379, %p380
      %p382 = scmp.ne.s32.totalorder %s371, %s374
      %p383 = scmp.eq.s32.totalorder %s42, 3
      %p384 = por %p382, %p383
      %p385 = scmp.ne.s32.totalorder %s374, %s375
      %p386 = scmp.eq.s32.totalorder %s42, 0
      %p387 = por %p385, %p386
      %p388 = scmp.ne.s32.totalorder %s374, %s375
      %p389 = scmp.eq.s32.totalorder %s43, 3
      %p390 = por %p388, %p389
      %p392 = scmp.ne.s32.totalorder %s375, %s391
      %p393 = scmp.eq.s32.totalorder %s43, 0
      %p394 = por %p392, %p393
      %s395 = ssub.s32 %s44, %s56
      %p396 = scmp.eq.s32.totalorder %s395, 0
      %s398 = sadd.s32 %s397, 1
      %s399 = scalar_select %p396, %s397, %s398
      %p402 = pneg %p396
      %p403 = scmp.eq.s32.totalorder %s37, 3
      %p404 = por %p402, %p403
      %p405 = scmp.ne.s32.totalorder %s397, %s400
      %p406 = scmp.eq.s32.totalorder %s37, 0
      %p407 = por %p405, %p406
      %p408 = scmp.ne.s32.totalorder %s397, %s400
      %p409 = scmp.eq.s32.totalorder %s42, 3
      %p410 = por %p408, %p409
      %p411 = scmp.ne.s32.totalorder %s400, %s401
      %p412 = scmp.eq.s32.totalorder %s42, 0
      %p413 = por %p411, %p412
      %p414 = scmp.ne.s32.totalorder %s400, %s401
      %p415 = scmp.eq.s32.totalorder %s43, 3
      %p416 = por %p414, %p415
      %p418 = scmp.ne.s32.totalorder %s401, %s417
      %p419 = scmp.eq.s32.totalorder %s43, 0
      %p420 = por %p418, %p419
      %p421 = scmp.le.s32.totalorder 1, %s37
      %p422 = scmp.lt.s32.totalorder %s37, 5
      %p423 = pnand %p421, %p422
      %p424 = pneg %p423
      // Predicated region
      $region9: #{tpu_custom_call.1} parent=5 // pred_check
        _
      $region10: #{tpu_custom_call.1} parent=5 // pred_check_branch
        %426 = sbr.rel (%p423) target = $region12
      $region11: #{tpu_custom_call.1} parent=5 // pred_region
        %s427 = ssub.s32 %s37, 1
      $region12: #{tpu_custom_call.1} parent=5 // pred_fallthru
        _
      %p428 = scmp.lt.s32.totalorder %s37, 4
      // Predicated region
      $region13: #{tpu_custom_call.1} parent=5 // pred_check
        %p429 = pneg %p428
      $region14: #{tpu_custom_call.1} parent=5 // pred_check_branch
        %431 = sbr.rel (%p429) target = $region16
      $region15: #{tpu_custom_call.1} parent=5 // pred_region
        // Predicated region
        $region17: #{tpu_custom_call.1} parent=15 // pred_check
          %p432 = pneg %p69
        $region18: #{tpu_custom_call.1} parent=15 // pred_check_branch
          %434 = sbr.rel (%p432) target = $region20
        $region19: #{tpu_custom_call.1} parent=15 // pred_region
          %s435 = sand.u32 %s59, 1
          %s436 = scalar_lea.sflag [#allocation4], %s435
          %s437 = sand.u32 %s59, 1
          %s438 = smul.addr %s437, 8
          %s439 = scalar_lea.vmem [#allocation3], %s438
          %s441 = ssub.s32 128, 128
          %442 = vsyncadd %s436, %s441
          %s443 = smul.addr %s44, 128
          %s444 = scalar_lea.hbm %s0, %s443
          %s446 = sshll.u32 %s439, 4
          %s447 = int_to_ptr.vmem [resolvable:$true] %s446
          %449 = dma.hbm_to_vmem [thread:$0]  %s444, 128, %s447, %s436
        $region20: #{tpu_custom_call.1} parent=15 // pred_fallthru
          _
        // Predicated region
        $region21: #{tpu_custom_call.1} parent=15 // pred_check
          %p450 = pneg %p95
        $region22: #{tpu_custom_call.1} parent=15 // pred_check_branch
          %452 = sbr.rel (%p450) target = $region24
        $region23: #{tpu_custom_call.1} parent=15 // pred_region
          %s453 = sand.u32 %s37, 1
          %s454 = scalar_lea.sflag [#allocation7], %s453
          %s455 = sand.u32 %s85, 1
          %s456 = smul.addr %s455, 16
          %s457 = scalar_lea.vmem [#allocation6], %s456
          %s459 = ssub.s32 256, 256
          %460 = vsyncadd %s454, %s459
          %s461 = smul.addr %s45, 4
          %s462 = smul.addr %s461, 64
          %s463 = scalar_lea.hbm %s1, %s462
          %s464 = sshll.u32 %s457, 4
          %s465 = int_to_ptr.vmem [resolvable:$true] %s464
          %470 = dma.hbm_to_vmem [thread:$0]  %s463, 256, %s465, %s454, 64, 64, 4
        $region24: #{tpu_custom_call.1} parent=15 // pred_fallthru
          _
        // Predicated region
        $region25: #{tpu_custom_call.1} parent=15 // pred_check
          %p471 = pneg %p121
        $region26: #{tpu_custom_call.1} parent=15 // pred_check_branch
          %473 = sbr.rel (%p471) target = $region28
        $region27: #{tpu_custom_call.1} parent=15 // pred_region
          %p474 = scmp.lt.s32.totalorder %s45, 1
          %s475 = scalar_select %p474, %s45, 1
          %s476 = scalar_lea.vmem %s2, %s475
        $region28: #{tpu_custom_call.1} parent=15 // pred_fallthru
          _
        // Predicated region
        $region29: #{tpu_custom_call.1} parent=15 // pred_check
          %p477 = pneg %p147
        $region30: #{tpu_custom_call.1} parent=15 // pred_check_branch
          %479 = sbr.rel (%p477) target = $region32
        $region31: #{tpu_custom_call.1} parent=15 // pred_region
          %s480 = sand.u32 %s37, 1
          %s481 = scalar_lea.sflag [#allocation7], %s480
          %s482 = sand.u32 %s137, 1
          %s483 = smul.addr %s482, 16
          %s484 = scalar_lea.vmem [#allocation8], %s483
          %s486 = ssub.s32 256, 256
          %487 = vsyncadd %s481, %s486
          %s488 = smul.addr %s45, 4
          %s489 = smul.addr %s488, 64
          %s490 = scalar_lea.hbm %s3, %s489
          %s491 = sshll.u32 %s484, 4
          %s492 = int_to_ptr.vmem [resolvable:$true] %s491
          %497 = dma.hbm_to_vmem [thread:$0]  %s490, 256, %s492, %s481, 64, 64, 4
        $region32: #{tpu_custom_call.1} parent=15 // pred_fallthru
          _
        // Predicated region
        $region33: #{tpu_custom_call.1} parent=15 // pred_check
          %p498 = pneg %p173
        $region34: #{tpu_custom_call.1} parent=15 // pred_check_branch
          %500 = sbr.rel (%p498) target = $region36
        $region35: #{tpu_custom_call.1} parent=15 // pred_region
          %s501 = sand.u32 %s37, 1
          %s502 = scalar_lea.sflag [#allocation10], %s501
          %s503 = sand.u32 %s163, 1
          %s504 = scalar_lea.vmem [#allocation9], %s503
          %s506 = ssub.s32 16, 16
          %507 = vsyncadd %s502, %s506
          %s508 = smul.addr %s45, 16
          %s509 = scalar_lea.hbm %s4, %s508
          %s511 = sshll.u32 %s504, 4
          %s512 = int_to_ptr.vmem [resolvable:$true] %s511
          %514 = dma.hbm_to_vmem [thread:$0]  %s509, 16, %s512, %s502
        $region36: #{tpu_custom_call.1} parent=15 // pred_fallthru
          _
        // Predicated region
        $region37: #{tpu_custom_call.1} parent=15 // pred_check
          %p515 = pneg %p199
        $region38: #{tpu_custom_call.1} parent=15 // pred_check_branch
          %517 = sbr.rel (%p515) target = $region40
        $region39: #{tpu_custom_call.1} parent=15 // pred_region
          %s518 = sand.u32 %s37, 1
          %s519 = scalar_lea.sflag [#allocation10], %s518
          %s520 = sand.u32 %s189, 1
          %s521 = scalar_lea.vmem [#allocation11], %s520
          %s523 = ssub.s32 16, 16
          %524 = vsyncadd %s519, %s523
          %s525 = smul.addr %s45, 16
          %s526 = scalar_lea.hbm %s5, %s525
          %s528 = sshll.u32 %s521, 4
          %s529 = int_to_ptr.vmem [resolvable:$true] %s528
          %531 = dma.hbm_to_vmem [thread:$0]  %s526, 16, %s529, %s519
        $region40: #{tpu_custom_call.1} parent=15 // pred_fallthru
          _
        // Predicated region
        $region41: #{tpu_custom_call.1} parent=15 // pred_check
          %p532 = pneg %p225
        $region42: #{tpu_custom_call.1} parent=15 // pred_check_branch
          %534 = sbr.rel (%p532) target = $region44
        $region43: #{tpu_custom_call.1} parent=15 // pred_region
          %s535 = sand.u32 %s37, 1
          %s536 = scalar_lea.sflag [#allocation13], %s535
          %s537 = sand.u32 %s215, 1
          %s538 = scalar_lea.vmem [#allocation12], %s537
          %s540 = ssub.s32 16, 16
          %541 = vsyncadd %s536, %s540
          %s542 = smul.addr %s45, 16
          %s543 = scalar_lea.hbm %s6, %s542
          %s545 = sshll.u32 %s538, 4
          %s546 = int_to_ptr.vmem [resolvable:$true] %s545
          %548 = dma.hbm_to_vmem [thread:$0]  %s543, 16, %s546, %s536
        $region44: #{tpu_custom_call.1} parent=15 // pred_fallthru
          _
        // Predicated region
        $region45: #{tpu_custom_call.1} parent=15 // pred_check
          %p549 = pneg %p251
        $region46: #{tpu_custom_call.1} parent=15 // pred_check_branch
          %551 = sbr.rel (%p549) target = $region48
        $region47: #{tpu_custom_call.1} parent=15 // pred_region
          %s552 = sand.u32 %s37, 1
          %s553 = scalar_lea.sflag [#allocation13], %s552
          %s554 = sand.u32 %s241, 1
          %s555 = smul.addr %s554, 16
          %s556 = scalar_lea.vmem [#allocation14], %s555
          %s558 = ssub.s32 256, 256
          %559 = vsyncadd %s553, %s558
          %s560 = smul.addr %s45, 4
          %s561 = smul.addr %s560, 64
          %s562 = scalar_lea.hbm %s7, %s561
          %s563 = sshll.u32 %s556, 4
          %s564 = int_to_ptr.vmem [resolvable:$true] %s563
          %569 = dma.hbm_to_vmem [thread:$0]  %s562, 256, %s564, %s553, 64, 64, 4
        $region48: #{tpu_custom_call.1} parent=15 // pred_fallthru
          _
        // Predicated region
        $region49: #{tpu_custom_call.1} parent=15 // pred_check
          %p570 = pneg %p277
        $region50: #{tpu_custom_call.1} parent=15 // pred_check_branch
          %572 = sbr.rel (%p570) target = $region52
        $region51: #{tpu_custom_call.1} parent=15 // pred_region
          %s573 = sand.u32 %s267, 1
          %s574 = scalar_lea.sflag [#allocation16], %s573
          %s575 = sand.u32 %s267, 1
          %s576 = scalar_lea.vmem [#allocation15], %s575
          %s578 = ssub.s32 16, 16
          %579 = vsyncadd %s574, %s578
          %s580 = smul.addr %s45, 16
          %s581 = scalar_lea.hbm %s8, %s580
          %s583 = sshll.u32 %s576, 4
          %s584 = int_to_ptr.vmem [resolvable:$true] %s583
          %586 = dma.hbm_to_vmem [thread:$0]  %s581, 16, %s584, %s574
        $region52: #{tpu_custom_call.1} parent=15 // pred_fallthru
          _
        // Predicated region
        $region53: #{tpu_custom_call.1} parent=15 // pred_check
          %p587 = pneg %p303
        $region54: #{tpu_custom_call.1} parent=15 // pred_check_branch
          %589 = sbr.rel (%p587) target = $region56
        $region55: #{tpu_custom_call.1} parent=15 // pred_region
          %p590 = scmp.lt.s32.totalorder %s45, 1
          %s591 = scalar_select %p590, %s45, 1
          %s592 = smul.addr %s591, 4
          %s593 = smul.addr %s592, 4
          %s594 = scalar_lea.vmem %s9, %s593
        $region56: #{tpu_custom_call.1} parent=15 // pred_fallthru
          _
        // Predicated region
        $region57: #{tpu_custom_call.1} parent=15 // pred_check
          %p595 = pneg %p329
        $region58: #{tpu_custom_call.1} parent=15 // pred_check_branch
          %597 = sbr.rel (%p595) target = $region60
        $region59: #{tpu_custom_call.1} parent=15 // pred_region
          %p598 = scmp.lt.s32.totalorder %s45, 1
          %s599 = scalar_select %p598, %s45, 1
          %s600 = scalar_lea.vmem %s10, %s599
        $region60: #{tpu_custom_call.1} parent=15 // pred_fallthru
          _
        // Predicated region
        $region61: #{tpu_custom_call.1} parent=15 // pred_check
          %p601 = pneg %p355
        $region62: #{tpu_custom_call.1} parent=15 // pred_check_branch
          %603 = sbr.rel (%p601) target = $region64
        $region63: #{tpu_custom_call.1} parent=15 // pred_region
          %p604 = scmp.lt.s32.totalorder %s45, 1
          %s605 = scalar_select %p604, %s45, 1
          %s606 = scalar_lea.vmem %s11, %s605
        $region64: #{tpu_custom_call.1} parent=15 // pred_fallthru
          _
        // Predicated region
        $region65: #{tpu_custom_call.1} parent=15 // pred_check
          %p607 = pneg %p381
        $region66: #{tpu_custom_call.1} parent=15 // pred_check_branch
          %609 = sbr.rel (%p607) target = $region68
        $region67: #{tpu_custom_call.1} parent=15 // pred_region
          %p610 = scmp.lt.s32.totalorder %s45, 1
          %s611 = scalar_select %p610, %s45, 1
          %s612 = scalar_lea.vmem %s12, %s611
        $region68: #{tpu_custom_call.1} parent=15 // pred_fallthru
          _
      $region16: #{tpu_custom_call.1} parent=5 // pred_fallthru
        _
      %p613 = scmp.le.s32.totalorder 1, %s37
      %p614 = scmp.lt.s32.totalorder %s37, 5
      %p615 = pnand %p613, %p614
      %p616 = pneg %p615
      // Predicated region
      $region69: #{tpu_custom_call.1} parent=5 // pred_check
        _
      $region70: #{tpu_custom_call.1} parent=5 // pred_check_branch
        %618 = sbr.rel (%p615) target = $region72
      $region71: #{tpu_custom_call.1} parent=5 // pred_region
        %s619 = ssub.s32 %s37, 1
        %s620 = sand.u32 %s62, 1
        %s621 = scalar_lea.sflag [#allocation4], %s620
        %s622 = sand.u32 %s62, 1
        %s623 = smul.addr %s622, 8
        %s624 = scalar_lea.vmem [#allocation3], %s623
        // Predicated region
        $region73: #{tpu_custom_call.1} parent=71 // pred_check
          %p625 = pneg %p75
        $region74: #{tpu_custom_call.1} parent=71 // pred_check_branch
          %627 = sbr.rel (%p625) target = $region76
        $region75: #{tpu_custom_call.1} parent=71 // pred_region
          %628 = dma.done %s621, 128
        $region76: #{tpu_custom_call.1} parent=71 // pred_fallthru
          _
        %s629 = sand.u32 %s42, 1
        %s630 = scalar_lea.sflag [#allocation7], %s629
        %s631 = sand.u32 %s88, 1
        %s632 = smul.addr %s631, 16
        %s633 = scalar_lea.vmem [#allocation6], %s632
        // Predicated region
        $region77: #{tpu_custom_call.1} parent=71 // pred_check
          %p634 = pneg %p101
        $region78: #{tpu_custom_call.1} parent=71 // pred_check_branch
          %636 = sbr.rel (%p634) target = $region80
        $region79: #{tpu_custom_call.1} parent=71 // pred_region
          %637 = dma.done %s630, 256
        $region80: #{tpu_custom_call.1} parent=71 // pred_fallthru
          _
        %s638 = sand.u32 %s42, 1
        %s639 = scalar_lea.sflag [#allocation7], %s638
        %s640 = sand.u32 %s140, 1
        %s641 = smul.addr %s640, 16
        %s642 = scalar_lea.vmem [#allocation8], %s641
        // Predicated region
        $region81: #{tpu_custom_call.1} parent=71 // pred_check
          %p643 = pneg %p153
        $region82: #{tpu_custom_call.1} parent=71 // pred_check_branch
          %645 = sbr.rel (%p643) target = $region84
        $region83: #{tpu_custom_call.1} parent=71 // pred_region
          %646 = dma.done %s639, 256
        $region84: #{tpu_custom_call.1} parent=71 // pred_fallthru
          _
        %s647 = sand.u32 %s42, 1
        %s648 = scalar_lea.sflag [#allocation10], %s647
        %s649 = sand.u32 %s166, 1
        %s650 = scalar_lea.vmem [#allocation9], %s649
        // Predicated region
        $region85: #{tpu_custom_call.1} parent=71 // pred_check
          %p651 = pneg %p179
        $region86: #{tpu_custom_call.1} parent=71 // pred_check_branch
          %653 = sbr.rel (%p651) target = $region88
        $region87: #{tpu_custom_call.1} parent=71 // pred_region
          %654 = dma.done %s648, 16
        $region88: #{tpu_custom_call.1} parent=71 // pred_fallthru
          _
        %s655 = sand.u32 %s42, 1
        %s656 = scalar_lea.sflag [#allocation10], %s655
        %s657 = sand.u32 %s192, 1
        %s658 = scalar_lea.vmem [#allocation11], %s657
        // Predicated region
        $region89: #{tpu_custom_call.1} parent=71 // pred_check
          %p659 = pneg %p205
        $region90: #{tpu_custom_call.1} parent=71 // pred_check_branch
          %661 = sbr.rel (%p659) target = $region92
        $region91: #{tpu_custom_call.1} parent=71 // pred_region
          %662 = dma.done %s656, 16
        $region92: #{tpu_custom_call.1} parent=71 // pred_fallthru
          _
        %s663 = sand.u32 %s42, 1
        %s664 = scalar_lea.sflag [#allocation13], %s663
        %s665 = sand.u32 %s218, 1
        %s666 = scalar_lea.vmem [#allocation12], %s665
        // Predicated region
        $region93: #{tpu_custom_call.1} parent=71 // pred_check
          %p667 = pneg %p231
        $region94: #{tpu_custom_call.1} parent=71 // pred_check_branch
          %669 = sbr.rel (%p667) target = $region96
        $region95: #{tpu_custom_call.1} parent=71 // pred_region
          %670 = dma.done %s664, 16
        $region96: #{tpu_custom_call.1} parent=71 // pred_fallthru
          _
        %s671 = sand.u32 %s42, 1
        %s672 = scalar_lea.sflag [#allocation13], %s671
        %s673 = sand.u32 %s244, 1
        %s674 = smul.addr %s673, 16
        %s675 = scalar_lea.vmem [#allocation14], %s674
        // Predicated region
        $region97: #{tpu_custom_call.1} parent=71 // pred_check
          %p676 = pneg %p257
        $region98: #{tpu_custom_call.1} parent=71 // pred_check_branch
          %678 = sbr.rel (%p676) target = $region100
        $region99: #{tpu_custom_call.1} parent=71 // pred_region
          %679 = dma.done %s672, 256
        $region100: #{tpu_custom_call.1} parent=71 // pred_fallthru
          _
        %s680 = sand.u32 %s270, 1
        %s681 = scalar_lea.sflag [#allocation16], %s680
        %s682 = sand.u32 %s270, 1
        %s683 = scalar_lea.vmem [#allocation15], %s682
        // Predicated region
        $region101: #{tpu_custom_call.1} parent=71 // pred_check
          %p684 = pneg %p283
        $region102: #{tpu_custom_call.1} parent=71 // pred_check_branch
          %686 = sbr.rel (%p684) target = $region104
        $region103: #{tpu_custom_call.1} parent=71 // pred_region
          %687 = dma.done %s681, 16
        $region104: #{tpu_custom_call.1} parent=71 // pred_fallthru
          _
        %s688 = sand.u32 %s62, 1
        %s689 = scalar_lea.sflag [#allocation4], %s688
        %s690 = sand.u32 %s62, 1
        %s691 = smul.addr %s690, 8
        %s692 = scalar_lea.vmem [#allocation3], %s691
        %p693 = pneg %p75
        %p694 = pneg %p72
        %s695 = sand.u32 %s42, 1
        %s696 = scalar_lea.sflag [#allocation7], %s695
        %s697 = sand.u32 %s88, 1
        %s698 = smul.addr %s697, 16
        %s699 = scalar_lea.vmem [#allocation6], %s698
        %p700 = pneg %p101
        %p701 = pneg %p98
        %p702 = scmp.lt.s32.totalorder %s47, 1
        %s703 = scalar_select %p702, %s47, 1
        %s704 = scalar_lea.vmem %s2, %s703
        %p705 = pneg %p127
        %p706 = pneg %p124
        %s707 = sand.u32 %s42, 1
        %s708 = scalar_lea.sflag [#allocation7], %s707
        %s709 = sand.u32 %s140, 1
        %s710 = smul.addr %s709, 16
        %s711 = scalar_lea.vmem [#allocation8], %s710
        %p712 = pneg %p153
        %p713 = pneg %p150
        %s714 = sand.u32 %s42, 1
        %s715 = scalar_lea.sflag [#allocation10], %s714
        %s716 = sand.u32 %s166, 1
        %s717 = scalar_lea.vmem [#allocation9], %s716
        %p718 = pneg %p179
        %p719 = pneg %p176
        %s720 = sand.u32 %s42, 1
        %s721 = scalar_lea.sflag [#allocation10], %s720
        %s722 = sand.u32 %s192, 1
        %s723 = scalar_lea.vmem [#allocation11], %s722
        %p724 = pneg %p205
        %p725 = pneg %p202
        %s726 = sand.u32 %s42, 1
        %s727 = scalar_lea.sflag [#allocation13], %s726
        %s728 = sand.u32 %s218, 1
        %s729 = scalar_lea.vmem [#allocation12], %s728
        %p730 = pneg %p231
        %p731 = pneg %p228
        %s732 = sand.u32 %s42, 1
        %s733 = scalar_lea.sflag [#allocation13], %s732
        %s734 = sand.u32 %s244, 1
        %s735 = smul.addr %s734, 16
        %s736 = scalar_lea.vmem [#allocation14], %s735
        %p737 = pneg %p257
        %p738 = pneg %p254
        %s739 = sand.u32 %s270, 1
        %s740 = scalar_lea.sflag [#allocation16], %s739
        %s741 = sand.u32 %s270, 1
        %s742 = scalar_lea.vmem [#allocation15], %s741
        %p743 = pneg %p283
        %p744 = pneg %p280
        %p745 = scmp.lt.s32.totalorder %s47, 1
        %s746 = scalar_select %p745, %s47, 1
        %s747 = smul.addr %s746, 4
        %s748 = smul.addr %s747, 4
        %s749 = scalar_lea.vmem %s9, %s748
        %p750 = pneg %p309
        %p751 = pneg %p306
        %p752 = scmp.lt.s32.totalorder %s47, 1
        %s753 = scalar_select %p752, %s47, 1
        %s754 = scalar_lea.vmem %s10, %s753
        %p755 = pneg %p335
        %p756 = pneg %p332
        %p757 = scmp.lt.s32.totalorder %s47, 1
        %s758 = scalar_select %p757, %s47, 1
        %s759 = scalar_lea.vmem %s11, %s758
        %p760 = pneg %p361
        %p761 = pneg %p358
        %p762 = scmp.lt.s32.totalorder %s47, 1
        %s763 = scalar_select %p762, %s47, 1
        %s764 = scalar_lea.vmem %s12, %s763
        %p765 = pneg %p387
        %p766 = pneg %p384
        %p767 = pneg %p413
        %p768 = pneg %p410
        %s769 = sand.u32 %s400, 1
        %s770 = scalar_lea.sflag [#allocation5], %s769
        %s771 = sand.u32 %s400, 1
        %s772 = smul.addr %s771, 8
        %s773 = scalar_lea.vmem [#allocation17], %s772
        %p774 = scmp.lt.s32.totalorder %s47, 1
        %s775 = scalar_select %p774, %s47, 1
        %s776 = scalar_lea.vmem %s2, %s775
        %p777 = scmp.lt.s32.totalorder %s47, 1
        %s778 = scalar_select %p777, %s47, 1
        %s779 = smul.addr %s778, 4
        %s780 = smul.addr %s779, 4
        %s781 = scalar_lea.vmem %s9, %s780
        %p782 = scmp.lt.s32.totalorder %s47, 1
        %s783 = scalar_select %p782, %s47, 1
        %s784 = scalar_lea.vmem %s10, %s783
        %p785 = scmp.lt.s32.totalorder %s47, 1
        %s786 = scalar_select %p785, %s47, 1
        %s787 = scalar_lea.vmem %s11, %s786
        %p788 = scmp.lt.s32.totalorder %s47, 1
        %s789 = scalar_select %p788, %s47, 1
        %s790 = scalar_lea.vmem %s12, %s789
        %p792 = scmp.eq.s32.totalorder %s47, 0
        // Predicated region
        $region105: #{tpu_custom_call.1} parent=71 // pred_check
          %p793 = pneg %p792
        $region106: #{tpu_custom_call.1} parent=71 // pred_check_branch
          %795 = sbr.rel (%p793) target = $region108
        $region107: #{tpu_custom_call.1} parent=71 // pred_region
          %v796 = vld [vmem:[%s624] sm:$0xff]
          %v797 = vpack.c.bf16 %v796, %v796
          %vm798 = vcmask 257024
          %799 = vst.msk [vmem:[#allocation2] sm:$0xf] %vm798, %v797
        $region108: #{tpu_custom_call.1} parent=71 // pred_fallthru
          _
        %v800 = vld [vmem:[#allocation2] sm:$0xf]
        %v801 = vunpack.c.l.bf16 %v800
        %v802 = vld [vmem:[%s633] sm:$0xf]
        %v803 = vld [vmem:[%s633 + $0x4] sm:$0xf]
        %v804 = vld [vmem:[%s633 + $0x8] sm:$0xf]
        %v805 = vld [vmem:[%s633 + $0xc] sm:$0xf]
        %v806 = vld [vmem:[%s776] sm:$0x1]
        %v808 = vlaneseq
        %v809 = vshrl.u32 %v808, 7
        %v810 = vsub.s32 0, %v809
        %v811 = vrot.slane %v806, %v810
        %v817 = vunpack.c.l.b16 %v802
        %v818 = vunpack.c.l.b16 %v803
        %v819 = vunpack.c.l.b16 %v804
        %v820 = vunpack.c.l.b16 %v805
        %v821 = vpack.c.b16 %v818, %v817
        %v822 = vpack.c.b16 %v820, %v819
        %vm825 = vcmask 261120
        %v827 = vsel %vm825, %v800, 0
        %829 = vmatprep.subr.bf16.mxu0 0
        %830 = vmatpush1.bf16.msra.mxu0 %v821
        %831 = vmatprep.subr.bf16.mxu0 0
        %832 = vmatpush1.bf16.msra.mxu0 %v822
        %833 = vmatprep.subr.bf16.mxu0 0
        %834 = vmatpush1.bf16.msra.mxu0 0
        %835 = vmatprep.subr.bf16.mxu0 0
        %836 = vmatpush1.bf16.msra.mxu0 0
        %837 = vmatprep.subr.bf16.mxu0 0
        %838 = vmatpush1.bf16.msra.mxu0 0
        %839 = vmatprep.subr.bf16.mxu0 0
        %840 = vmatpush1.bf16.msra.mxu0 0
        %841 = vmatprep.subr.bf16.mxu0 0
        %842 = vmatpush1.bf16.msra.mxu0 0
        %843 = vmatprep.subr.bf16.mxu0 0
        %844 = vmatpush1.bf16.msra.mxu0 0
        %845 = vmatprep.subr.bf16.mxu0 0
        %846 = vmatpush1.bf16.msra.mxu0 0
        %847 = vmatprep.subr.bf16.mxu0 0
        %848 = vmatpush1.bf16.msra.mxu0 0
        %849 = vmatprep.subr.bf16.mxu0 0
        %850 = vmatpush1.bf16.msra.mxu0 0
        %851 = vmatprep.subr.bf16.mxu0 0
        %852 = vmatpush1.bf16.msra.mxu0 0
        %853 = vmatprep.subr.bf16.mxu0 0
        %854 = vmatpush1.bf16.msra.mxu0 0
        %855 = vmatprep.subr.bf16.mxu0 0
        %856 = vmatpush1.bf16.msra.mxu0 0
        %857 = vmatprep.subr.bf16.mxu0 0
        %858 = vmatpush1.bf16.msra.mxu0 0
        %859 = vmatprep.subr.bf16.mxu0 0
        %860 = vmatpush1.bf16.msra.mxu0 0
        %861 = vmatprep.mubr.bf16.mxu0 0
        %862 = vmatmul.mubr.bf16.gmra.mrb[0].mxu0 %v827
        %v863 = vpop.f32.mrb[0].mxu0
        %v864 = vadd.f32 %v811, %v863
        %v865 = vpop.f32.mrb[0].mxu0
        %v866 = vpop.f32.mrb[0].mxu0
        %v867 = vpop.f32.mrb[0].mxu0
        %868 = vdwg.mxu0
        %v869 = vmul.f32 %v864, 0.35355338
        %871 = vrot.lane.b32.xlu0 %v869, 120
        %v872 = vpop.permute.xlu0 %871
        %874 = vrot.lane.b32.xlu0 %v869, 112
        %v875 = vpop.permute.xlu0 %874
        %877 = vrot.lane.b32.xlu0 %v869, 104
        %v878 = vpop.permute.xlu0 %877
        %v880 = vpack.c.bf16 %v869, %v869
        %v881 = vpack.c.bf16 %v872, %v872
        %v882 = vpack.c.bf16 %v875, %v875
        %v883 = vpack.c.bf16 %v878, %v878
        %885 = vrot.lane.b32.xlu0 %v864, 120
        %v886 = vpop.permute.xlu0 %885
        %888 = vrot.lane.b32.xlu0 %v864, 112
        %v889 = vpop.permute.xlu0 %888
        %891 = vrot.lane.b32.xlu0 %v864, 104
        %v892 = vpop.permute.xlu0 %891
        %v894 = vpack.c.bf16 %v864, %v864
        %v895 = vpack.c.bf16 %v886, %v886
        %v896 = vpack.c.bf16 %v889, %v889
        %v897 = vpack.c.bf16 %v892, %v892
        %v898 = vlaneseq
        %v899 = vshrl.u32 %v898, 7
        %v900 = vlaneseq
        %v901 = vand.u32 %v900, 127
        %vm902 = vcmp.ge.s32.totalorder %v899, %v901
        %v903 = vsel %vm902, 0.0, -1e+30
        %905 = vrot.lane.b32.xlu0 %v894, 96
        %v906 = vpop.permute.xlu0 %905
        %vm907 = vcmask 64512
        %v909 = vsel %vm907, %v880, 0
        %v912 = vsel %vm907, %v906, 0
        %914 = vmatprep.subr.bf16.mxu0 0
        %915 = vmatpush1.bf16.xpose.msra.mxu0 %v912
        %916 = vmatprep.subr.bf16.mxu0 0
        %917 = vmatpush1.bf16.xpose.msra.mxu0 0
        %918 = vmatprep.subr.bf16.mxu0 0
        %919 = vmatpush1.bf16.xpose.msra.mxu0 0
        %920 = vmatprep.subr.bf16.mxu0 0
        %921 = vmatpush1.bf16.xpose.msra.mxu0 0
        %922 = vmatprep.subr.bf16.mxu0 0
        %923 = vmatpush1.bf16.xpose.msra.mxu0 0
        %924 = vmatprep.subr.bf16.mxu0 0
        %925 = vmatpush1.bf16.xpose.msra.mxu0 0
        %926 = vmatprep.subr.bf16.mxu0 0
        %927 = vmatpush1.bf16.xpose.msra.mxu0 0
        %928 = vmatprep.subr.bf16.mxu0 0
        %929 = vmatpush1.bf16.xpose.msra.mxu0 0
        %930 = vmatprep.subr.bf16.mxu0 0
        %931 = vmatpush1.bf16.xpose.msra.mxu0 0
        %932 = vmatprep.subr.bf16.mxu0 0
        %933 = vmatpush1.bf16.xpose.msra.mxu0 0
        %934 = vmatprep.subr.bf16.mxu0 0
        %935 = vmatpush1.bf16.xpose.msra.mxu0 0
        %936 = vmatprep.subr.bf16.mxu0 0
        %937 = vmatpush1.bf16.xpose.msra.mxu0 0
        %938 = vmatprep.subr.bf16.mxu0 0
        %939 = vmatpush1.bf16.xpose.msra.mxu0 0
        %940 = vmatprep.subr.bf16.mxu0 0
        %941 = vmatpush1.bf16.xpose.msra.mxu0 0
        %942 = vmatprep.subr.bf16.mxu0 0
        %943 = vmatpush1.bf16.xpose.msra.mxu0 0
        %944 = vmatprep.subr.bf16.mxu0 0
        %945 = vmatpush1.bf16.xpose.msra.mxu0 0
        %946 = vmatprep.mubr.bf16.mxu0 0
        %947 = vmatmul.mubr.bf16.gmra.mrb[0].mxu0 %v909
        %v948 = vpop.f32.mrb[0].mxu0
        %v949 = vadd.f32 %v903, %v948
        %v950 = vpop.f32.mrb[0].mxu0
        %v951 = vpop.f32.mrb[0].mxu0
        %v952 = vpop.f32.mrb[0].mxu0
        %953 = vdwg.mxu0
        %955 = vrot.lane.b32.xlu0 %v895, 96
        %v956 = vpop.permute.xlu0 %955
        %v958 = vsel %vm907, %v881, 0
        %v961 = vsel %vm907, %v956, 0
        %963 = vmatprep.subr.bf16.mxu0 0
        %964 = vmatpush1.bf16.xpose.msra.mxu0 %v961
        %965 = vmatprep.subr.bf16.mxu0 0
        %966 = vmatpush1.bf16.xpose.msra.mxu0 0
        %967 = vmatprep.subr.bf16.mxu0 0
        %968 = vmatpush1.bf16.xpose.msra.mxu0 0
        %969 = vmatprep.subr.bf16.mxu0 0
        %970 = vmatpush1.bf16.xpose.msra.mxu0 0
        %971 = vmatprep.subr.bf16.mxu0 0
        %972 = vmatpush1.bf16.xpose.msra.mxu0 0
        %973 = vmatprep.subr.bf16.mxu0 0
        %974 = vmatpush1.bf16.xpose.msra.mxu0 0
        %975 = vmatprep.subr.bf16.mxu0 0
        %976 = vmatpush1.bf16.xpose.msra.mxu0 0
        %977 = vmatprep.subr.bf16.mxu0 0
        %978 = vmatpush1.bf16.xpose.msra.mxu0 0
        %979 = vmatprep.subr.bf16.mxu0 0
        %980 = vmatpush1.bf16.xpose.msra.mxu0 0
        %981 = vmatprep.subr.bf16.mxu0 0
        %982 = vmatpush1.bf16.xpose.msra.mxu0 0
        %983 = vmatprep.subr.bf16.mxu0 0
        %984 = vmatpush1.bf16.xpose.msra.mxu0 0
        %985 = vmatprep.subr.bf16.mxu0 0
        %986 = vmatpush1.bf16.xpose.msra.mxu0 0
        %987 = vmatprep.subr.bf16.mxu0 0
        %988 = vmatpush1.bf16.xpose.msra.mxu0 0
        %989 = vmatprep.subr.bf16.mxu0 0
        %990 = vmatpush1.bf16.xpose.msra.mxu0 0
        %991 = vmatprep.subr.bf16.mxu0 0
        %992 = vmatpush1.bf16.xpose.msra.mxu0 0
        %993 = vmatprep.subr.bf16.mxu0 0
        %994 = vmatpush1.bf16.xpose.msra.mxu0 0
        %995 = vmatprep.mubr.bf16.mxu0 0
        %996 = vmatmul.mubr.bf16.gmra.mrb[0].mxu0 %v958
        %v997 = vpop.f32.mrb[0].mxu0
        %v998 = vadd.f32 %v903, %v997
        %v999 = vpop.f32.mrb[0].mxu0
        %v1000 = vpop.f32.mrb[0].mxu0
        %v1001 = vpop.f32.mrb[0].mxu0
        %1002 = vdwg.mxu0
        %1004 = vrot.lane.b32.xlu0 %v896, 96
        %v1005 = vpop.permute.xlu0 %1004
        %v1007 = vsel %vm907, %v882, 0
        %v1010 = vsel %vm907, %v1005, 0
        %1012 = vmatprep.subr.bf16.mxu0 0
        %1013 = vmatpush1.bf16.xpose.msra.mxu0 %v1010
        %1014 = vmatprep.subr.bf16.mxu0 0
        %1015 = vmatpush1.bf16.xpose.msra.mxu0 0
        %1016 = vmatprep.subr.bf16.mxu0 0
        %1017 = vmatpush1.bf16.xpose.msra.mxu0 0
        %1018 = vmatprep.subr.bf16.mxu0 0
        %1019 = vmatpush1.bf16.xpose.msra.mxu0 0
        %1020 = vmatprep.subr.bf16.mxu0 0
        %1021 = vmatpush1.bf16.xpose.msra.mxu0 0
        %1022 = vmatprep.subr.bf16.mxu0 0
        %1023 = vmatpush1.bf16.xpose.msra.mxu0 0
        %1024 = vmatprep.subr.bf16.mxu0 0
        %1025 = vmatpush1.bf16.xpose.msra.mxu0 0
        %1026 = vmatprep.subr.bf16.mxu0 0
        %1027 = vmatpush1.bf16.xpose.msra.mxu0 0
        %1028 = vmatprep.subr.bf16.mxu0 0
        %1029 = vmatpush1.bf16.xpose.msra.mxu0 0
        %1030 = vmatprep.subr.bf16.mxu0 0
        %1031 = vmatpush1.bf16.xpose.msra.mxu0 0
        %1032 = vmatprep.subr.bf16.mxu0 0
        %1033 = vmatpush1.bf16.xpose.msra.mxu0 0
        %1034 = vmatprep.subr.bf16.mxu0 0
        %1035 = vmatpush1.bf16.xpose.msra.mxu0 0
        %1036 = vmatprep.subr.bf16.mxu0 0
        %1037 = vmatpush1.bf16.xpose.msra.mxu0 0
        %1038 = vmatprep.subr.bf16.mxu0 0
        %1039 = vmatpush1.bf16.xpose.msra.mxu0 0
        %1040 = vmatprep.subr.bf16.mxu0 0
        %1041 = vmatpush1.bf16.xpose.msra.mxu0 0
        %1042 = vmatprep.subr.bf16.mxu0 0
        %1043 = vmatpush1.bf16.xpose.msra.mxu0 0
        %1044 = vmatprep.mubr.bf16.mxu0 0
        %1045 = vmatmul.mubr.bf16.gmra.mrb[0].mxu0 %v1007
        %v1046 = vpop.f32.mrb[0].mxu0
        %v1047 = vadd.f32 %v903, %v1046
        %v1048 = vpop.f32.mrb[0].mxu0
        %v1049 = vpop.f32.mrb[0].mxu0
        %v1050 = vpop.f32.mrb[0].mxu0
        %1051 = vdwg.mxu0
        %1053 = vrot.lane.b32.xlu0 %v897, 96
        %v1054 = vpop.permute.xlu0 %1053
        %v1056 = vsel %vm907, %v883, 0
        %v1059 = vsel %vm907, %v1054, 0
        %1061 = vmatprep.subr.bf16.mxu0 0
        %1062 = vmatpush1.bf16.xpose.msra.mxu0 %v1059
        %1063 = vmatprep.subr.bf16.mxu0 0
        %1064 = vmatpush1.bf16.xpose.msra.mxu0 0
        %1065 = vmatprep.subr.bf16.mxu0 0
        %1066 = vmatpush1.bf16.xpose.msra.mxu0 0
        %1067 = vmatprep.subr.bf16.mxu0 0
        %1068 = vmatpush1.bf16.xpose.msra.mxu0 0
        %1069 = vmatprep.subr.bf16.mxu0 0
        %1070 = vmatpush1.bf16.xpose.msra.mxu0 0
        %1071 = vmatprep.subr.bf16.mxu0 0
        %1072 = vmatpush1.bf16.xpose.msra.mxu0 0
        %1073 = vmatprep.subr.bf16.mxu0 0
        %1074 = vmatpush1.bf16.xpose.msra.mxu0 0
        %1075 = vmatprep.subr.bf16.mxu0 0
        %1076 = vmatpush1.bf16.xpose.msra.mxu0 0
        %1077 = vmatprep.subr.bf16.mxu0 0
        %1078 = vmatpush1.bf16.xpose.msra.mxu0 0
        %1079 = vmatprep.subr.bf16.mxu0 0
        %1080 = vmatpush1.bf16.xpose.msra.mxu0 0
        %1081 = vmatprep.subr.bf16.mxu0 0
        %1082 = vmatpush1.bf16.xpose.msra.mxu0 0
        %1083 = vmatprep.subr.bf16.mxu0 0
        %1084 = vmatpush1.bf16.xpose.msra.mxu0 0
        %1085 = vmatprep.subr.bf16.mxu0 0
        %1086 = vmatpush1.bf16.xpose.msra.mxu0 0
        %1087 = vmatprep.subr.bf16.mxu0 0
        %1088 = vmatpush1.bf16.xpose.msra.mxu0 0
        %1089 = vmatprep.subr.bf16.mxu0 0
        %1090 = vmatpush1.bf16.xpose.msra.mxu0 0
        %1091 = vmatprep.subr.bf16.mxu0 0
        %1092 = vmatpush1.bf16.xpose.msra.mxu0 0
        %1093 = vmatprep.mubr.bf16.mxu0 0
        %1094 = vmatmul.mubr.bf16.gmra.mrb[0].mxu0 %v1056
        %v1095 = vpop.f32.mrb[0].mxu0
        %v1096 = vadd.f32 %v903, %v1095
        %v1097 = vpop.f32.mrb[0].mxu0
        %v1098 = vpop.f32.mrb[0].mxu0
        %v1099 = vpop.f32.mrb[0].mxu0
        %1100 = vdwg.mxu0
        %v1101 = vsel %vm907, %v949, -inf
        %1102 = vmax.xlane.f32.xlu0 %v1101
        %v1103 = vpop.xlane.xlu0 %1102
        %v1104 = vsel %vm907, %v998, -inf
        %1105 = vmax.xlane.f32.xlu0 %v1104
        %v1106 = vpop.xlane.xlu0 %1105
        %v1107 = vsel %vm907, %v1047, -inf
        %1108 = vmax.xlane.f32.xlu0 %v1107
        %v1109 = vpop.xlane.xlu0 %1108
        %v1110 = vsel %vm907, %v1096, -inf
        %1111 = vmax.xlane.f32.xlu0 %v1110
        %v1112 = vpop.xlane.xlu0 %1111
        %v1113 = vsub.f32 %v949, %v1103
        %v1114 = vsub.f32 %v998, %v1106
        %v1115 = vsub.f32 %v1047, %v1109
        %v1116 = vsub.f32 %v1096, %v1112
        %v1117 = vmul.f32 %v1113, 1.442695
        %v1118 = vpow.pop %v1117
        %v1119 = vmul.f32 %v1114, 1.442695
        %v1120 = vpow.pop %v1119
        %v1121 = vmul.f32 %v1115, 1.442695
        %v1122 = vpow.pop %v1121
        %v1123 = vmul.f32 %v1116, 1.442695
        %v1124 = vpow.pop %v1123
        %v1125 = vsel %vm907, %v1118, 0.0
        %1126 = vadd.xlane.f32.xlu0 %v1125
        %v1127 = vpop.xlane.xlu0 %1126
        %v1128 = vsel %vm907, %v1120, 0.0
        %1129 = vadd.xlane.f32.xlu0 %v1128
        %v1130 = vpop.xlane.xlu0 %1129
        %v1131 = vsel %vm907, %v1122, 0.0
        %1132 = vadd.xlane.f32.xlu0 %v1131
        %v1133 = vpop.xlane.xlu0 %1132
        %v1134 = vsel %vm907, %v1124, 0.0
        %1135 = vadd.xlane.f32.xlu0 %v1134
        %v1136 = vpop.xlane.xlu0 %1135
        %v1137 = vrcp.pop %v1127
        %v1138 = vrcp.pop %v1130
        %v1139 = vrcp.pop %v1133
        %v1140 = vrcp.pop %v1136
        %v1141 = vmul.f32 %v1118, %v1137
        %v1142 = vmul.f32 %v1120, %v1138
        %v1143 = vmul.f32 %v1122, %v1139
        %v1144 = vmul.f32 %v1124, %v1140
        %v1145 = vpack.c.bf16 %v1141, %v1141
        %v1146 = vpack.c.bf16 %v1142, %v1142
        %v1147 = vpack.c.bf16 %v1143, %v1143
        %v1148 = vpack.c.bf16 %v1144, %v1144
        %1149 = vrot.lane.b32.xlu0 %v894, 64
        %v1150 = vpop.permute.xlu0 %1149
        %v1152 = vsel %vm907, %v1145, 0
        %vm1154 = vcmask 1043456
        %v1156 = vsel %vm1154, %v1150, 0
        %1158 = vmatprep.subr.bf16.mxu0 0
        %1159 = vmatpush1.bf16.msra.mxu0 %v1156
        %1160 = vmatprep.subr.bf16.mxu0 0
        %1161 = vmatpush1.bf16.msra.mxu0 0
        %1162 = vmatprep.subr.bf16.mxu0 0
        %1163 = vmatpush1.bf16.msra.mxu0 0
        %1164 = vmatprep.subr.bf16.mxu0 0
        %1165 = vmatpush1.bf16.msra.mxu0 0
        %1166 = vmatprep.subr.bf16.mxu0 0
        %1167 = vmatpush1.bf16.msra.mxu0 0
        %1168 = vmatprep.subr.bf16.mxu0 0
        %1169 = vmatpush1.bf16.msra.mxu0 0
        %1170 = vmatprep.subr.bf16.mxu0 0
        %1171 = vmatpush1.bf16.msra.mxu0 0
        %1172 = vmatprep.subr.bf16.mxu0 0
        %1173 = vmatpush1.bf16.msra.mxu0 0
        %1174 = vmatprep.subr.bf16.mxu0 0
        %1175 = vmatpush1.bf16.msra.mxu0 0
        %1176 = vmatprep.subr.bf16.mxu0 0
        %1177 = vmatpush1.bf16.msra.mxu0 0
        %1178 = vmatprep.subr.bf16.mxu0 0
        %1179 = vmatpush1.bf16.msra.mxu0 0
        %1180 = vmatprep.subr.bf16.mxu0 0
        %1181 = vmatpush1.bf16.msra.mxu0 0
        %1182 = vmatprep.subr.bf16.mxu0 0
        %1183 = vmatpush1.bf16.msra.mxu0 0
        %1184 = vmatprep.subr.bf16.mxu0 0
        %1185 = vmatpush1.bf16.msra.mxu0 0
        %1186 = vmatprep.subr.bf16.mxu0 0
        %1187 = vmatpush1.bf16.msra.mxu0 0
        %1188 = vmatprep.subr.bf16.mxu0 0
        %1189 = vmatpush1.bf16.msra.mxu0 0
        %1190 = vmatprep.mubr.bf16.mxu0 0
        %1191 = vmatmul.mubr.bf16.gmra.mrb[0].mxu0 %v1152
        %v1192 = vpop.f32.mrb[0].mxu0
        %v1193 = vadd.f32 0.0, %v1192
        %v1194 = vpop.f32.mrb[0].mxu0
        %v1195 = vpop.f32.mrb[0].mxu0
        %v1196 = vpop.f32.mrb[0].mxu0
        %1197 = vdwg.mxu0
        %1198 = vrot.lane.b32.xlu0 %v895, 64
        %v1199 = vpop.permute.xlu0 %1198
        %v1201 = vsel %vm907, %v1146, 0
        %v1204 = vsel %vm1154, %v1199, 0
        %1206 = vmatprep.subr.bf16.mxu0 0
        %1207 = vmatpush1.bf16.msra.mxu0 %v1204
        %1208 = vmatprep.subr.bf16.mxu0 0
        %1209 = vmatpush1.bf16.msra.mxu0 0
        %1210 = vmatprep.subr.bf16.mxu0 0
        %1211 = vmatpush1.bf16.msra.mxu0 0
        %1212 = vmatprep.subr.bf16.mxu0 0
        %1213 = vmatpush1.bf16.msra.mxu0 0
        %1214 = vmatprep.subr.bf16.mxu0 0
        %1215 = vmatpush1.bf16.msra.mxu0 0
        %1216 = vmatprep.subr.bf16.mxu0 0
        %1217 = vmatpush1.bf16.msra.mxu0 0
        %1218 = vmatprep.subr.bf16.mxu0 0
        %1219 = vmatpush1.bf16.msra.mxu0 0
        %1220 = vmatprep.subr.bf16.mxu0 0
        %1221 = vmatpush1.bf16.msra.mxu0 0
        %1222 = vmatprep.subr.bf16.mxu0 0
        %1223 = vmatpush1.bf16.msra.mxu0 0
        %1224 = vmatprep.subr.bf16.mxu0 0
        %1225 = vmatpush1.bf16.msra.mxu0 0
        %1226 = vmatprep.subr.bf16.mxu0 0
        %1227 = vmatpush1.bf16.msra.mxu0 0
        %1228 = vmatprep.subr.bf16.mxu0 0
        %1229 = vmatpush1.bf16.msra.mxu0 0
        %1230 = vmatprep.subr.bf16.mxu0 0
        %1231 = vmatpush1.bf16.msra.mxu0 0
        %1232 = vmatprep.subr.bf16.mxu0 0
        %1233 = vmatpush1.bf16.msra.mxu0 0
        %1234 = vmatprep.subr.bf16.mxu0 0
        %1235 = vmatpush1.bf16.msra.mxu0 0
        %1236 = vmatprep.subr.bf16.mxu0 0
        %1237 = vmatpush1.bf16.msra.mxu0 0
        %1238 = vmatprep.mubr.bf16.mxu0 0
        %1239 = vmatmul.mubr.bf16.gmra.mrb[0].mxu0 %v1201
        %v1240 = vpop.f32.mrb[0].mxu0
        %v1241 = vadd.f32 0.0, %v1240
        %v1242 = vpop.f32.mrb[0].mxu0
        %v1243 = vpop.f32.mrb[0].mxu0
        %v1244 = vpop.f32.mrb[0].mxu0
        %1245 = vdwg.mxu0
        %1246 = vrot.lane.b32.xlu0 %v896, 64
        %v1247 = vpop.permute.xlu0 %1246
        %v1249 = vsel %vm907, %v1147, 0
        %v1252 = vsel %vm1154, %v1247, 0
        %1254 = vmatprep.subr.bf16.mxu0 0
        %1255 = vmatpush1.bf16.msra.mxu0 %v1252
        %1256 = vmatprep.subr.bf16.mxu0 0
        %1257 = vmatpush1.bf16.msra.mxu0 0
        %1258 = vmatprep.subr.bf16.mxu0 0
        %1259 = vmatpush1.bf16.msra.mxu0 0
        %1260 = vmatprep.subr.bf16.mxu0 0
        %1261 = vmatpush1.bf16.msra.mxu0 0
        %1262 = vmatprep.subr.bf16.mxu0 0
        %1263 = vmatpush1.bf16.msra.mxu0 0
        %1264 = vmatprep.subr.bf16.mxu0 0
        %1265 = vmatpush1.bf16.msra.mxu0 0
        %1266 = vmatprep.subr.bf16.mxu0 0
        %1267 = vmatpush1.bf16.msra.mxu0 0
        %1268 = vmatprep.subr.bf16.mxu0 0
        %1269 = vmatpush1.bf16.msra.mxu0 0
        %1270 = vmatprep.subr.bf16.mxu0 0
        %1271 = vmatpush1.bf16.msra.mxu0 0
        %1272 = vmatprep.subr.bf16.mxu0 0
        %1273 = vmatpush1.bf16.msra.mxu0 0
        %1274 = vmatprep.subr.bf16.mxu0 0
        %1275 = vmatpush1.bf16.msra.mxu0 0
        %1276 = vmatprep.subr.bf16.mxu0 0
        %1277 = vmatpush1.bf16.msra.mxu0 0
        %1278 = vmatprep.subr.bf16.mxu0 0
        %1279 = vmatpush1.bf16.msra.mxu0 0
        %1280 = vmatprep.subr.bf16.mxu0 0
        %1281 = vmatpush1.bf16.msra.mxu0 0
        %1282 = vmatprep.subr.bf16.mxu0 0
        %1283 = vmatpush1.bf16.msra.mxu0 0
        %1284 = vmatprep.subr.bf16.mxu0 0
        %1285 = vmatpush1.bf16.msra.mxu0 0
        %1286 = vmatprep.mubr.bf16.mxu0 0
        %1287 = vmatmul.mubr.bf16.gmra.mrb[0].mxu0 %v1249
        %v1288 = vpop.f32.mrb[0].mxu0
        %v1289 = vadd.f32 0.0, %v1288
        %v1290 = vpop.f32.mrb[0].mxu0
        %v1291 = vpop.f32.mrb[0].mxu0
        %v1292 = vpop.f32.mrb[0].mxu0
        %1293 = vdwg.mxu0
        %1294 = vrot.lane.b32.xlu0 %v897, 64
        %v1295 = vpop.permute.xlu0 %1294
        %v1297 = vsel %vm907, %v1148, 0
        %v1300 = vsel %vm1154, %v1295, 0
        %1302 = vmatprep.subr.bf16.mxu0 0
        %1303 = vmatpush1.bf16.msra.mxu0 %v1300
        %1304 = vmatprep.subr.bf16.mxu0 0
        %1305 = vmatpush1.bf16.msra.mxu0 0
        %1306 = vmatprep.subr.bf16.mxu0 0
        %1307 = vmatpush1.bf16.msra.mxu0 0
        %1308 = vmatprep.subr.bf16.mxu0 0
        %1309 = vmatpush1.bf16.msra.mxu0 0
        %1310 = vmatprep.subr.bf16.mxu0 0
        %1311 = vmatpush1.bf16.msra.mxu0 0
        %1312 = vmatprep.subr.bf16.mxu0 0
        %1313 = vmatpush1.bf16.msra.mxu0 0
        %1314 = vmatprep.subr.bf16.mxu0 0
        %1315 = vmatpush1.bf16.msra.mxu0 0
        %1316 = vmatprep.subr.bf16.mxu0 0
        %1317 = vmatpush1.bf16.msra.mxu0 0
        %1318 = vmatprep.subr.bf16.mxu0 0
        %1319 = vmatpush1.bf16.msra.mxu0 0
        %1320 = vmatprep.subr.bf16.mxu0 0
        %1321 = vmatpush1.bf16.msra.mxu0 0
        %1322 = vmatprep.subr.bf16.mxu0 0
        %1323 = vmatpush1.bf16.msra.mxu0 0
        %1324 = vmatprep.subr.bf16.mxu0 0
        %1325 = vmatpush1.bf16.msra.mxu0 0
        %1326 = vmatprep.subr.bf16.mxu0 0
        %1327 = vmatpush1.bf16.msra.mxu0 0
        %1328 = vmatprep.subr.bf16.mxu0 0
        %1329 = vmatpush1.bf16.msra.mxu0 0
        %1330 = vmatprep.subr.bf16.mxu0 0
        %1331 = vmatpush1.bf16.msra.mxu0 0
        %1332 = vmatprep.subr.bf16.mxu0 0
        %1333 = vmatpush1.bf16.msra.mxu0 0
        %1334 = vmatprep.mubr.bf16.mxu0 0
        %1335 = vmatmul.mubr.bf16.gmra.mrb[0].mxu0 %v1297
        %v1336 = vpop.f32.mrb[0].mxu0
        %v1337 = vadd.f32 0.0, %v1336
        %v1338 = vpop.f32.mrb[0].mxu0
        %v1339 = vpop.f32.mrb[0].mxu0
        %v1340 = vpop.f32.mrb[0].mxu0
        %1341 = vdwg.mxu0
        %1343 = vrot.lane.b32.xlu0 %v1241, 8
        %v1344 = vpop.permute.xlu0 %1343
        %1347 = vrot.lane.b32.xlu0 %v1289, 16
        %v1348 = vpop.permute.xlu0 %1347
        %1351 = vrot.lane.b32.xlu0 %v1337, 24
        %v1352 = vpop.permute.xlu0 %1351
        %v1354 = vsel %vm907, %v1193, %v1344
        %vm1355 = vcmask 130048
        %v1356 = vsel %vm1355, %v1354, %v1348
        %vm1357 = vcmask 195584
        %v1358 = vsel %vm1357, %v1356, %v1352
        %v1359 = vpack.c.bf16 %v1358, %v1358
        %v1360 = vld [vmem:[%s642] sm:$0xf]
        %v1361 = vld [vmem:[%s642 + $0x4] sm:$0xf]
        %v1362 = vld [vmem:[%s642 + $0x8] sm:$0xf]
        %v1363 = vld [vmem:[%s642 + $0xc] sm:$0xf]
        %v1364 = vld [vmem:[%s650] sm:$0x1]
        %v1366 = vlaneseq
        %v1367 = vshrl.u32 %v1366, 7
        %v1368 = vsub.s32 0, %v1367
        %v1369 = vrot.slane %v1364, %v1368
        %v1375 = vunpack.c.l.b16 %v1360
        %v1376 = vunpack.c.l.b16 %v1361
        %v1377 = vunpack.c.l.b16 %v1362
        %v1378 = vunpack.c.l.b16 %v1363
        %v1379 = vpack.c.b16 %v1376, %v1375
        %v1380 = vpack.c.b16 %v1378, %v1377
        %v1384 = vsel %vm825, %v1359, 0
        %1386 = vmatprep.subr.bf16.mxu0 0
        %1387 = vmatpush1.bf16.msra.mxu0 %v1379
        %1388 = vmatprep.subr.bf16.mxu0 0
        %1389 = vmatpush1.bf16.msra.mxu0 %v1380
        %1390 = vmatprep.subr.bf16.mxu0 0
        %1391 = vmatpush1.bf16.msra.mxu0 0
        %1392 = vmatprep.subr.bf16.mxu0 0
        %1393 = vmatpush1.bf16.msra.mxu0 0
        %1394 = vmatprep.subr.bf16.mxu0 0
        %1395 = vmatpush1.bf16.msra.mxu0 0
        %1396 = vmatprep.subr.bf16.mxu0 0
        %1397 = vmatpush1.bf16.msra.mxu0 0
        %1398 = vmatprep.subr.bf16.mxu0 0
        %1399 = vmatpush1.bf16.msra.mxu0 0
        %1400 = vmatprep.subr.bf16.mxu0 0
        %1401 = vmatpush1.bf16.msra.mxu0 0
        %1402 = vmatprep.subr.bf16.mxu0 0
        %1403 = vmatpush1.bf16.msra.mxu0 0
        %1404 = vmatprep.subr.bf16.mxu0 0
        %1405 = vmatpush1.bf16.msra.mxu0 0
        %1406 = vmatprep.subr.bf16.mxu0 0
        %1407 = vmatpush1.bf16.msra.mxu0 0
        %1408 = vmatprep.subr.bf16.mxu0 0
        %1409 = vmatpush1.bf16.msra.mxu0 0
        %1410 = vmatprep.subr.bf16.mxu0 0
        %1411 = vmatpush1.bf16.msra.mxu0 0
        %1412 = vmatprep.subr.bf16.mxu0 0
        %1413 = vmatpush1.bf16.msra.mxu0 0
        %1414 = vmatprep.subr.bf16.mxu0 0
        %1415 = vmatpush1.bf16.msra.mxu0 0
        %1416 = vmatprep.subr.bf16.mxu0 0
        %1417 = vmatpush1.bf16.msra.mxu0 0
        %1418 = vmatprep.mubr.bf16.mxu0 0
        %1419 = vmatmul.mubr.bf16.gmra.mrb[0].mxu0 %v1384
        %v1420 = vpop.f32.mrb[0].mxu0
        %v1421 = vadd.f32 %v1369, %v1420
        %v1422 = vpop.f32.mrb[0].mxu0
        %v1423 = vpop.f32.mrb[0].mxu0
        %v1424 = vpop.f32.mrb[0].mxu0
        %1425 = vdwg.mxu0
        %v1426 = vadd.f32 %v801, %v1421
        %v1427 = vld [vmem:[%s658] sm:$0x1]
        %v1428 = vld [vmem:[%s666] sm:$0x1]
        %v1429 = vsel %vm825, %v1426, 0.0
        %1430 = vadd.xlane.f32.xlu0 %v1429
        %v1431 = vpop.xlane.xlu0 %1430
        %v1432 = vrcp.pop 32.0
        %v1433 = vmul.f32 %v1431, %v1432
        %v1434 = vsub.f32 %v1426, %v1433
        %v1435 = vmul.f32 %v1434, %v1434
        %v1436 = vsel %vm825, %v1435, 0.0
        %1437 = vadd.xlane.f32.xlu0 %v1436
        %v1438 = vpop.xlane.xlu0 %1437
        %v1439 = vmul.f32 %v1438, %v1432
        %v1440 = vadd.f32 %v1439, 1e-05
        %v1441 = vrsqrt.pop %v1440
        %v1442 = vmul.f32 %v1434, %v1441
        %v1444 = vlaneseq
        %v1445 = vshrl.u32 %v1444, 7
        %v1446 = vsub.s32 0, %v1445
        %v1447 = vrot.slane %v1427, %v1446
        %v1449 = vmul.f32 %v1442, %v1447
        %v1451 = vlaneseq
        %v1452 = vshrl.u32 %v1451, 7
        %v1453 = vsub.s32 0, %v1452
        %v1454 = vrot.slane %v1428, %v1453
        %v1456 = vadd.f32 %v1449, %v1454
        %v1457 = vpack.c.bf16 %v1456, %v1456
        %v1458 = vld [vmem:[%s675] sm:$0xf]
        %v1459 = vld [vmem:[%s675 + $0x4] sm:$0xf]
        %v1460 = vld [vmem:[%s675 + $0x8] sm:$0xf]
        %v1461 = vld [vmem:[%s675 + $0xc] sm:$0xf]
        %v1462 = vld [vmem:[%s683] sm:$0x1]
        %v1464 = vlaneseq
        %v1465 = vshrl.u32 %v1464, 7
        %v1466 = vsub.s32 0, %v1465
        %v1467 = vrot.slane %v1462, %v1466
        %v1473 = vunpack.c.l.b16 %v1458
        %v1474 = vunpack.c.l.b16 %v1459
        %v1475 = vunpack.c.l.b16 %v1460
        %v1476 = vunpack.c.l.b16 %v1461
        %v1477 = vpack.c.b16 %v1474, %v1473
        %v1478 = vpack.c.b16 %v1476, %v1475
        %v1482 = vsel %vm825, %v1457, 0
        %1484 = vmatprep.subr.bf16.mxu0 0
        %1485 = vmatpush1.bf16.msra.mxu0 %v1477
        %1486 = vmatprep.subr.bf16.mxu0 0
        %1487 = vmatpush1.bf16.msra.mxu0 %v1478
        %1488 = vmatprep.subr.bf16.mxu0 0
        %1489 = vmatpush1.bf16.msra.mxu0 0
        %1490 = vmatprep.subr.bf16.mxu0 0
        %1491 = vmatpush1.bf16.msra.mxu0 0
        %1492 = vmatprep.subr.bf16.mxu0 0
        %1493 = vmatpush1.bf16.msra.mxu0 0
        %1494 = vmatprep.subr.bf16.mxu0 0
        %1495 = vmatpush1.bf16.msra.mxu0 0
        %1496 = vmatprep.subr.bf16.mxu0 0
        %1497 = vmatpush1.bf16.msra.mxu0 0
        %1498 = vmatprep.subr.bf16.mxu0 0
        %1499 = vmatpush1.bf16.msra.mxu0 0
        %1500 = vmatprep.subr.bf16.mxu0 0
        %1501 = vmatpush1.bf16.msra.mxu0 0
        %1502 = vmatprep.subr.bf16.mxu0 0
        %1503 = vmatpush1.bf16.msra.mxu0 0
        %1504 = vmatprep.subr.bf16.mxu0 0
        %1505 = vmatpush1.bf16.msra.mxu0 0
        %1506 = vmatprep.subr.bf16.mxu0 0
        %1507 = vmatpush1.bf16.msra.mxu0 0
        %1508 = vmatprep.subr.bf16.mxu0 0
        %1509 = vmatpush1.bf16.msra.mxu0 0
        %1510 = vmatprep.subr.bf16.mxu0 0
        %1511 = vmatpush1.bf16.msra.mxu0 0
        %1512 = vmatprep.subr.bf16.mxu0 0
        %1513 = vmatpush1.bf16.msra.mxu0 0
        %1514 = vmatprep.subr.bf16.mxu0 0
        %1515 = vmatpush1.bf16.msra.mxu0 0
        %1516 = vmatprep.mubr.bf16.mxu0 0
        %1517 = vmatmul.mubr.bf16.gmra.mrb[0].mxu0 %v1482
        %v1518 = vpop.f32.mrb[0].mxu0
        %v1519 = vadd.f32 %v1467, %v1518
        %v1520 = vpop.f32.mrb[0].mxu0
        %v1521 = vpop.f32.mrb[0].mxu0
        %v1522 = vpop.f32.mrb[0].mxu0
        %1523 = vdwg.mxu0
        %v1524 = vmax.f32 %v1519, 0.0
        %v1525 = vpack.c.bf16 %v1524, %v1524
        %v1526 = vld [vmem:[%s781] sm:$0xf]
        %v1527 = vld [vmem:[%s781 + $0x4] sm:$0xf]
        %v1528 = vld [vmem:[%s781 + $0x8] sm:$0xf]
        %v1529 = vld [vmem:[%s781 + $0xc] sm:$0xf]
        %v1530 = vld [vmem:[%s784] sm:$0x1]
        %v1532 = vlaneseq
        %v1533 = vshrl.u32 %v1532, 7
        %v1534 = vsub.s32 0, %v1533
        %v1535 = vrot.slane %v1530, %v1534
        %v1541 = vunpack.c.l.b16 %v1526
        %v1542 = vunpack.c.l.b16 %v1527
        %v1543 = vunpack.c.l.b16 %v1528
        %v1544 = vunpack.c.l.b16 %v1529
        %v1545 = vpack.c.b16 %v1542, %v1541
        %v1546 = vpack.c.b16 %v1544, %v1543
        %v1550 = vsel %vm825, %v1525, 0
        %1552 = vmatprep.subr.bf16.mxu0 0
        %1553 = vmatpush1.bf16.msra.mxu0 %v1545
        %1554 = vmatprep.subr.bf16.mxu0 0
        %1555 = vmatpush1.bf16.msra.mxu0 %v1546
        %1556 = vmatprep.subr.bf16.mxu0 0
        %1557 = vmatpush1.bf16.msra.mxu0 0
        %1558 = vmatprep.subr.bf16.mxu0 0
        %1559 = vmatpush1.bf16.msra.mxu0 0
        %1560 = vmatprep.subr.bf16.mxu0 0
        %1561 = vmatpush1.bf16.msra.mxu0 0
        %1562 = vmatprep.subr.bf16.mxu0 0
        %1563 = vmatpush1.bf16.msra.mxu0 0
        %1564 = vmatprep.subr.bf16.mxu0 0
        %1565 = vmatpush1.bf16.msra.mxu0 0
        %1566 = vmatprep.subr.bf16.mxu0 0
        %1567 = vmatpush1.bf16.msra.mxu0 0
        %1568 = vmatprep.subr.bf16.mxu0 0
        %1569 = vmatpush1.bf16.msra.mxu0 0
        %1570 = vmatprep.subr.bf16.mxu0 0
        %1571 = vmatpush1.bf16.msra.mxu0 0
        %1572 = vmatprep.subr.bf16.mxu0 0
        %1573 = vmatpush1.bf16.msra.mxu0 0
        %1574 = vmatprep.subr.bf16.mxu0 0
        %1575 = vmatpush1.bf16.msra.mxu0 0
        %1576 = vmatprep.subr.bf16.mxu0 0
        %1577 = vmatpush1.bf16.msra.mxu0 0
        %1578 = vmatprep.subr.bf16.mxu0 0
        %1579 = vmatpush1.bf16.msra.mxu0 0
        %1580 = vmatprep.subr.bf16.mxu0 0
        %1581 = vmatpush1.bf16.msra.mxu0 0
        %1582 = vmatprep.subr.bf16.mxu0 0
        %1583 = vmatpush1.bf16.msra.mxu0 0
        %1584 = vmatprep.mubr.bf16.mxu0 0
        %1585 = vmatmul.mubr.bf16.gmra.mrb[0].mxu0 %v1550
        %v1586 = vpop.f32.mrb[0].mxu0
        %v1587 = vadd.f32 %v1535, %v1586
        %v1588 = vpop.f32.mrb[0].mxu0
        %v1589 = vpop.f32.mrb[0].mxu0
        %v1590 = vpop.f32.mrb[0].mxu0
        %1591 = vdwg.mxu0
        %v1592 = vadd.f32 %v1456, %v1587
        %v1593 = vld [vmem:[%s787] sm:$0x1]
        %v1594 = vld [vmem:[%s790] sm:$0x1]
        %v1595 = vsel %vm825, %v1592, 0.0
        %1596 = vadd.xlane.f32.xlu0 %v1595
        %v1597 = vpop.xlane.xlu0 %1596
        %v1598 = vmul.f32 %v1597, %v1432
        %v1599 = vsub.f32 %v1592, %v1598
        %v1600 = vmul.f32 %v1599, %v1599
        %v1601 = vsel %vm825, %v1600, 0.0
        %1602 = vadd.xlane.f32.xlu0 %v1601
        %v1603 = vpop.xlane.xlu0 %1602
        %v1604 = vmul.f32 %v1603, %v1432
        %v1605 = vadd.f32 %v1604, 1e-05
        %v1606 = vrsqrt.pop %v1605
        %v1607 = vmul.f32 %v1599, %v1606
        %v1609 = vlaneseq
        %v1610 = vshrl.u32 %v1609, 7
        %v1611 = vsub.s32 0, %v1610
        %v1612 = vrot.slane %v1593, %v1611
        %v1614 = vmul.f32 %v1607, %v1612
        %v1616 = vlaneseq
        %v1617 = vshrl.u32 %v1616, 7
        %v1618 = vsub.s32 0, %v1617
        %v1619 = vrot.slane %v1594, %v1618
        %v1621 = vadd.f32 %v1614, %v1619
        %v1622 = vpack.c.bf16 %v1621, %v1621
        %vm1623 = vcmask 257024
        %1624 = vst.msk [vmem:[#allocation2] sm:$0xf] %vm1623, %v1622
        %1625 = vst.msk [vmem:[%s773] sm:$0xff] %vm825, %v1621
        %s1626 = sand.u32 %s400, 1
        %s1627 = scalar_lea.sflag [#allocation5], %s1626
        %s1628 = sand.u32 %s400, 1
        %s1629 = smul.addr %s1628, 8
        %s1630 = scalar_lea.vmem [#allocation17], %s1629
        // Predicated region
        $region109: #{tpu_custom_call.1} parent=71 // pred_check
          %p1631 = pneg %p410
        $region110: #{tpu_custom_call.1} parent=71 // pred_check_branch
          %1633 = sbr.rel (%p1631) target = $region112
        $region111: #{tpu_custom_call.1} parent=71 // pred_region
          %s1635 = ssub.s32 128, 128
          %1636 = vsyncadd %s1627, %s1635
          %s1637 = smul.addr %s46, 128
          %s1638 = scalar_lea.hbm %s13, %s1637
          %s1640 = sshll.u32 %s1630, 4
          %s1641 = int_to_ptr.vmem [resolvable:$true] %s1640
          %1643 = dma.vmem_to_hbm [thread:$0]  %s1641, 128, %s1638, %s1627
        $region112: #{tpu_custom_call.1} parent=71 // pred_fallthru
          _
      $region72: #{tpu_custom_call.1} parent=5 // pred_fallthru
        _
      %p1644 = scmp.le.s32.totalorder 2, %s37
      // Predicated region
      $region113: #{tpu_custom_call.1} parent=5 // pred_check
        %p1645 = pneg %p1644
      $region114: #{tpu_custom_call.1} parent=5 // pred_check_branch
        %1647 = sbr.rel (%p1645) target = $region116
      $region115: #{tpu_custom_call.1} parent=5 // pred_region
        %s1648 = ssub.s32 %s37, 2
        // Predicated region
        $region117: #{tpu_custom_call.1} parent=115 // pred_check
          %p1649 = pneg %p416
        $region118: #{tpu_custom_call.1} parent=115 // pred_check_branch
          %1651 = sbr.rel (%p1649) target = $region120
        $region119: #{tpu_custom_call.1} parent=115 // pred_region
          %s1652 = sand.u32 %s401, 1
          %s1653 = scalar_lea.sflag [#allocation5], %s1652
          %s1654 = sand.u32 %s401, 1
          %s1655 = smul.addr %s1654, 8
          %s1656 = scalar_lea.vmem [#allocation17], %s1655
          %1657 = dma.done %s1653, 128
        $region120: #{tpu_custom_call.1} parent=115 // pred_fallthru
          _
      $region116: #{tpu_custom_call.1} parent=5 // pred_fallthru
        _
    $region6: #{tpu_custom_call.1} parent=1 // loop_footer
      %s41 = sadd.s32 1, %s37
    $region7: #{tpu_custom_call.1} parent=1 // loop_footer_branch
      %36 = sbr.rel target = $region3
    $region8: #{tpu_custom_call.1} parent=1 // loop_exit
      _
    %1658 = vsyncpa [#allocation4], 1
    %s1659 = scalar_lea.sflag [#allocation4], 1
    %1660 = vsyncpa %s1659, 1
    %1661 = vsyncpa [#allocation7], 1
    %s1662 = scalar_lea.sflag [#allocation7], 1
    %1663 = vsyncpa %s1662, 1
    %1664 = vsyncpa [#allocation10], 1
    %s1665 = scalar_lea.sflag [#allocation10], 1
    %1666 = vsyncpa %s1665, 1
    %1667 = vsyncpa [#allocation13], 1
    %s1668 = scalar_lea.sflag [#allocation13], 1
    %1669 = vsyncpa %s1668, 1
    %1670 = vsyncpa [#allocation16], 1
    %s1671 = scalar_lea.sflag [#allocation16], 1
    %1672 = vsyncpa %s1671, 1
    %1673 = vsyncpa [#allocation5], 1
    %s1674 = scalar_lea.sflag [#allocation5], 1
    %1675 = vsyncpa %s1674, 1

</llo_original>
